<compile_context>
chip_gen: v7x
topology: tpu7x:2x2x1
jax: 0.10.0
libtpu: 0.0.40
codegen_flags: <defaults>
</compile_context>

<pallas_src>
import functools

import jax
import jax.numpy as jnp
from jax.experimental import pallas as pl
from jax.experimental.pallas import tpu as pltpu


# ---------------------------------------------------------------------------
# Generation-aware budgets and tile pickers
# ---------------------------------------------------------------------------
def _device_budgets():
    """(weight-block VMEM budget, vmem_limit_bytes) for the current TPU generation."""
    try:
        kind = jax.devices()[0].device_kind.lower()
    except Exception:  # pragma: no cover - defensive
        kind = ""
    if "v5" in kind or "v6" in kind:          # 128 MiB physical VMEM, 1 TensorCore
        return 8 * 1024 * 1024, 64 * 1024 * 1024
    # v7x / unknown: 64 MiB physical VMEM, 2 TensorCores -> smaller blocks, more steps
    return 4 * 1024 * 1024, 32 * 1024 * 1024


def _pick_col_tile(E, B, L1, isz, budget, min_steps=8):
    """Column tile (in units of 128 columns) for the Linear weight streaming kernel.

    Accounts for double-buffered weight + bias + output blocks and the resident x.
    Prefers >= min_steps grid steps (keeps both v7x TensorCores fed) when possible.
    """
    divs = [d for d in range(L1, 0, -1) if L1 % d == 0]

    def vmem(d):
        tn = 128 * d
        return (2 * (E + B + 1) * tn + B * E) * isz

    fits = [d for d in divs if vmem(d) <= budget]
    if not fits:
        return 1                      # tn = 128: always tiny, always legal
    for d in fits:                    # descending: largest block with enough steps
        if L1 // d >= min_steps:
            return d
    return fits[0]                    # tiny problems: just take the largest fit


def _pick_time_tile(L1, h_isz, budget):
    """Time tile for the fused conv kernel: divisor of L1, lane-aligned (x128) or full."""
    cands = [d for d in range(L1, 0, -1) if L1 % d == 0 and (d % 128 == 0 or d == L1)]
    for d in cands:
        vmem = (2 * 128 * d * h_isz        # double-buffered h block
                + 2 * 4 * d * 4            # double-buffered output block
                + 640 * (d + 2) * 4)       # z / y / h_all / shift intermediates (f32)
        if vmem <= budget:
            return d
    return cands[-1]                  # smallest aligned divisor (or L1 itself)


# ---------------------------------------------------------------------------
# Kernel 1: Linear + ReLU (weight streamed in lane-dense column tiles)
# ---------------------------------------------------------------------------
def _linear_relu_kernel(x_ref, w_ref, b_ref, o_ref):
    acc = jnp.dot(x_ref[...], w_ref[...], preferred_element_type=jnp.float32)
    o_ref[...] = jnp.maximum(acc + b_ref[...], 0.0).astype(o_ref.dtype)


def linear_relu(x, w, b, tn, out_dtype, vmem_limit):
    B, E = x.shape
    N = w.shape[1]
    return pl.pallas_call(
        _linear_relu_kernel,
        out_shape=jax.ShapeDtypeStruct((B, N), out_dtype),
        grid=(N // tn,),
        in_specs=[
            pl.BlockSpec((B, E), lambda n: (0, 0)),        # x: tiny, resident
            pl.BlockSpec((E, tn), lambda n: (0, n)),       # weight: streamed column tiles
            pl.BlockSpec((1, tn), lambda n: (0, n)),       # bias (f32)
        ],
        out_specs=pl.BlockSpec((B, tn), lambda n: (0, n)),
        compiler_params=pltpu.CompilerParams(
            dimension_semantics=("parallel",),
            vmem_limit_bytes=vmem_limit,
        ),
    )(x, w, b)


# ---------------------------------------------------------------------------
# Kernel 2: fused ConvTranspose1d(128->64) + ReLU + ConvTranspose1d(64->1) + Tanh
# ---------------------------------------------------------------------------
# ConvTranspose1d(k=4, s=2, p=1), decomposed by output parity (h is (C=128, time)):
#   ye[i] = y1[2i]   = relu(w1^T h[i] + w3^T h[i-1] + b1)
#   yo[i] = y1[2i+1] = relu(w2^T h[i] + w0^T h[i+1] + b1)
# Second conv (+ time interleave), 4 output samples per h-time-step i:
#   out[4i+0] = v1.ye[i] + v3.yo[i-1] + b2
#   out[4i+1] = v2.ye[i] + v0.yo[i]   + b2
#   out[4i+2] = v3.ye[i] + v1.yo[i]   + b2
#   out[4i+3] = v2.yo[i] + v0.ye[i+1] + b2
# with implicit h[-1]=h[L1]=0 (zero halo columns) and y1[-1]=y1[2*L1]=0 (in-kernel mask).
def _fused_convt_kernel(h_ref, hp_ref, hn_ref, wc1_ref, b1_ref, wab_ref, b2_ref, o_ref):
    tl = h_ref.shape[-1]
    t = pl.program_id(1)
    last_t = pl.num_programs(1) - 1

    # Channels x time, columns for times t0-1 .. t0+tl (tl+2 columns).
    h_all = jnp.concatenate([hp_ref[...], h_ref[...], hn_ref[...]], axis=1)

    # Conv1, both output parities, as one K=128 MXU matmul:
    #   z[:,j] = [w3^T h; w2^T h; w1^T h; w0^T h](time t0-1+j)
    z = jnp.dot(wc1_ref[...], h_all, preferred_element_type=jnp.float32)   # (256, tl+2)
    # y[:, j] = [ye[t0+j] (rows 0:64) ; yo[t0-1+j] (rows 64:128)],  j = 0..tl
    y = z[:128, : tl + 1] + z[128:, 1 : tl + 2]                            # (128, tl+1)
    y = jnp.maximum(y + b1_ref[...], 0.0)

    # Implicit conv2 padding y1[-1] = y1[2*L1] = 0: zero yo[-1] / ye[L1] at the edges.
    row = jax.lax.broadcasted_iota(jnp.int32, (128, tl + 1), 0)
    col = jax.lax.broadcasted_iota(jnp.int32, (128, tl + 1), 1)
    y = jnp.where((t == 0) & (col == 0) & (row >= 64), 0.0, y)
    y = jnp.where((t == last_t) & (col == tl) & (row < 64), 0.0, y)

    # Conv2 + interleave: one K=128 matmul -> 8 partial phases, then a tiny shift-add.
    zo = jnp.dot(wab_ref[...], y, preferred_element_type=jnp.float32)      # (8, tl+1)
    out = zo[:4, :tl] + zo[4:, 1 : tl + 1]                                 # (4, tl)
    o_ref[...] = jnp.tanh(out + b2_ref[...]).astype(o_ref.dtype)


def fused_conv_stack(h3, prepped, tl, vmem_limit):
    B, _, L1 = h3.shape
    tt = L1 // tl
    # One halo column per time tile; zeros at the global boundaries (h[-1] = h[L1] = 0).
    zero = jnp.zeros((B, 128, 1), h3.dtype)
    last = h3[:, :, tl - 1::tl]                               # (B,128,tt)
    first = h3[:, :, ::tl]                                    # (B,128,tt)
    h_prev = jnp.concatenate([zero, last[:, :, : tt - 1]], axis=2).transpose(0, 2, 1)[..., None]
    h_next = jnp.concatenate([first[:, :, 1:], zero], axis=2).transpose(0, 2, 1)[..., None]
    # TODO(synk): the halo columns could be emitted by stage 1 (or clamped element index
    # maps) to avoid these two tiny host-side gathers; kept explicit for robustness.

    return pl.pallas_call(
        _fused_convt_kernel,
        out_shape=jax.ShapeDtypeStruct((B, 4, L1), jnp.float32),
        grid=(B, tt),
        in_specs=[
            pl.BlockSpec((None, 128, tl), lambda b, t: (b, 0, t)),          # h tile (C x T)
            pl.BlockSpec((None, None, 128, 1), lambda b, t: (b, t, 0, 0)),  # h[:, t0-1]
            pl.BlockSpec((None, None, 128, 1), lambda b, t: (b, t, 0, 0)),  # h[:, t0+tl]
            pl.BlockSpec((256, 128), lambda b, t: (0, 0)),                  # conv1 weights (K-stacked)
            pl.BlockSpec((128, 1), lambda b, t: (0, 0)),                    # conv1 bias (f32)
            pl.BlockSpec((8, 128), lambda b, t: (0, 0)),                    # conv2+interleave weights (f32)
            pl.BlockSpec((4, 1), lambda b, t: (0, 0)),                      # conv2 bias (f32)
        ],
        out_specs=pl.BlockSpec((None, 4, tl), lambda b, t: (b, 0, t)),      # lane-dense phase planes
        compiler_params=pltpu.CompilerParams(
            dimension_semantics=("parallel", "parallel"),
            vmem_limit_bytes=vmem_limit,
        ),
    )(h3, h_prev, h_next, prepped["wc1"], prepped["b1"], prepped["wab"], prepped["b2"])


# ---------------------------------------------------------------------------
# One-time parameter preparation (hoisted off the forward hot path)
# ---------------------------------------------------------------------------
def prep_params(params, output_length, compute_dtype=jnp.bfloat16):
    L1 = output_length // 4
    cd = jnp.dtype(compute_dtype)

    # Linear weight/bias used in the PyTorch-native column order (c*L1 + t); the
    # Unflatten reshape to (B, 128, L1) is then free.
    w_lin = params["w_lin"].astype(cd)
    b_lin = params["b_lin"].reshape(1, 128 * L1).astype(jnp.float32)

    # Conv1: both phases K-stacked as one (256, 128) transposed weight:
    #   z = Wc @ h  ->  rows [0:64]=w3^T h, [64:128]=w2^T h, [128:192]=w1^T h, [192:256]=w0^T h
    w1 = params["w_ct1"]                                     # (128, 64, 4)
    wc1 = jnp.concatenate([w1[:, :, 3].T, w1[:, :, 2].T,
                           w1[:, :, 1].T, w1[:, :, 0].T], axis=0)            # (256, 128)
    b1c = jnp.concatenate([params["b_ct1"], params["b_ct1"]]).reshape(128, 1)

    # Conv2 taps folded (with the output interleave) into one (8, 128) weight operating
    # on y columns [ye | yo_prev]; rows 0:4 = same-column phases, rows 4:8 = next-column.
    v = params["w_ct2"][:, 0, :]                              # (64, 4): taps v0..v3
    v0, v1, v2, v3 = (v[:, k] for k in range(4))
    z64 = jnp.zeros((64,), jnp.float32)
    wab = jnp.stack([
        jnp.concatenate([v1, v3]),    # phase 0, same col:  v1.ye + v3.yo_prev
        jnp.concatenate([v2, z64]),   # phase 1, same col:  v2.ye
        jnp.concatenate([v3, z64]),   # phase 2, same col:  v3.ye
        jnp.concatenate([z64, z64]),  # phase 3, same col:  0
        jnp.concatenate([z64, z64]),  # phase 0, next col:  0
        jnp.concatenate([z64, v0]),   # phase 1, next col:  v0.yo
        jnp.concatenate([z64, v1]),   # phase 2, next col:  v1.yo
        jnp.concatenate([v0, v2]),    # phase 3, next col:  v0.ye_next + v2.yo
    ], axis=0).astype(jnp.float32)                            # (8, 128)
    b2c = jnp.full((4, 1), params["b_ct2"][0], jnp.float32)

    return {"w_lin": w_lin, "b_lin": b_lin,
            "wc1": wc1.astype(cd), "b1": b1c,                 # conv2 weights stay f32 (tiny)
            "wab": wab, "b2": b2c}


# ---------------------------------------------------------------------------
# Full forward pass
# ---------------------------------------------------------------------------
@functools.partial(jax.jit, static_argnums=2)
def audio_decoder_forward(x, prepped, output_length):
    assert output_length % 4 == 0
    B, E = x.shape
    L1 = output_length // 4
    cd = prepped["w_lin"].dtype
    isz = jnp.dtype(cd).itemsize
    blk_budget, vmem_limit = _device_budgets()

    # Stage 1: Linear + ReLU (weight streaming; bf16 weights/activations by default).
    d_lin = _pick_col_tile(E, B, L1, isz, blk_budget)
    h = linear_relu(x.astype(cd), prepped["w_lin"], prepped["b_lin"],
                    128 * d_lin, cd, vmem_limit)              # (B, 128*L1)
    h3 = h.reshape(B, 128, L1)                                # free: PyTorch Unflatten (N, C, L)

    # Stage 2: fused ConvT1 + ReLU + ConvT2 + Tanh (phase-planar output).
    tl = _pick_time_tile(L1, isz, blk_budget)
    out = fused_conv_stack(h3, prepped, tl, vmem_limit)       # (B, 4, L1) f32
    # Interleave the 4 phases; output is tiny so this XLA transpose is negligible.
    return out.transpose(0, 2, 1).reshape(B, 1, output_length)


# ---------------------------------------------------------------------------
# Pure-JAX reference (definitional conv-transpose) for the correctness check
# ---------------------------------------------------------------------------
def _convt_ref(x_ncl, w, b):  # x: (B, Cin, L), w: (Cin, Cout, K), stride 2, padding 1
    B, Cin, L = x_ncl.shape
    Cout, K = w.shape[1], w.shape[2]
    full = jnp.zeros((B, Cout, 2 * L + 2), jnp.float32)
    for k in range(K):
        contrib = jnp.einsum('bci,cd->bdi', x_ncl, w[:, :, k])
        full = full.at[:, :, k:k + 2 * L:2].add(contrib)
    return full[:, :, 1:1 + 2 * L] + b[None, :, None]


def reference_forward(x, params, output_length):
    B = x.shape[0]
    L1 = output_length // 4
    h = jnp.maximum(x @ params["w_lin"] + params["b_lin"], 0.0)
    h = h.reshape(B, 128, L1)
    h = jnp.maximum(_convt_ref(h, params["w_ct1"], params["b_ct1"]), 0.0)
    return jnp.tanh(_convt_ref(h, params["w_ct2"], params["b_ct2"]))


# ---------------------------------------------------------------------------
def init_params(key, encoded_dim, output_length):
    L1 = output_length // 4
    hidden = 128 * L1
    k = jax.random.split(key, 6)
    s = 0.05
    return {
        "w_lin": s * jax.random.normal(k[0], (encoded_dim, hidden), jnp.float32),
        "b_lin": s * jax.random.normal(k[1], (hidden,), jnp.float32),
        "w_ct1": s * jax.random.normal(k[2], (128, 64, 4), jnp.float32),
        "b_ct1": s * jax.random.normal(k[3], (64,), jnp.float32),
        "w_ct2": s * jax.random.normal(k[4], (64, 1, 4), jnp.float32),
        "b_ct2": s * jax.random.normal(k[5], (1,), jnp.float32),
    }


if __name__ == "__main__":
    def run_case(B, encoded_dim, out_len):
        key = jax.random.PRNGKey(0)
        pkey, xkey = jax.random.split(key)
        params = init_params(pkey, encoded_dim, out_len)
        x = jax.random.normal(xkey, (B, encoded_dim), jnp.float32)
        ref = jax.block_until_ready(reference_forward(x, params, out_len))

        # f32 path (tight check)
        out32 = jax.block_until_ready(
            audio_decoder_forward(x, prep_params(params, out_len, jnp.float32), out_len))
        assert out32.shape == (B, 1, out_len), out32.shape
        e32 = float(jnp.max(jnp.abs(out32 - ref)))
        assert e32 < 2e-3, f"f32 max abs err {e32}"

        # bf16 default path (loose check; f32 accumulation, f32 output)
        outbf = jax.block_until_ready(
            audio_decoder_forward(x, prep_params(params, out_len), out_len))
        ebf = float(jnp.max(jnp.abs(outbf - ref)))
        assert ebf < 5e-2, f"bf16 max abs err {ebf}"

    run_case(2, 32, 16)      # tiny case: single tile, full-array blocks
    run_case(2, 32, 8192)    # multi-tile case: weight streaming + inter-tile halos
    print("KERNEL_OK")
</pallas_src>

<mosaic_0001>
module attributes {stable_mosaic.version = 11 : i64} {
  func.func @_linear_relu_kernel(%arg0: i32, %arg1: memref<2x32xf32, #tpu.memory_space<vmem>>, %arg2: memref<32x512xf32, #tpu.memory_space<vmem>>, %arg3: memref<1x512xf32, #tpu.memory_space<vmem>>, %arg4: memref<2x512xf32, #tpu.memory_space<vmem>>) attributes {dimension_semantics = [#tpu.dimension_semantics<parallel>], iteration_bounds = array<i64: 1>, scalar_prefetch = 0 : i64, scratch_operands = 0 : i64, tpu.core_type = #tpu.core_type<tc>, window_params = [{pipeline_mode = #tpu.pipeline_mode<synchronous>, transform_indices = @transform_0, window_bounds = array<i64: 2, 32>}, {transform_indices = @transform_1, window_bounds = array<i64: 32, 512>}, {transform_indices = @transform_2, window_bounds = array<i64: 1, 512>}, {transform_indices = @transform_3, window_bounds = array<i64: 2, 512>}]} {
    %c0 = arith.constant 0 : index
    %c0_0 = arith.constant 0 : index
    %0 = vector.load %arg1[%c0, %c0_0] : memref<2x32xf32, #tpu.memory_space<vmem>>, vector<2x32xf32>
    %c0_1 = arith.constant 0 : index
    %c0_2 = arith.constant 0 : index
    %1 = vector.load %arg2[%c0_1, %c0_2] : memref<32x512xf32, #tpu.memory_space<vmem>>, vector<32x512xf32>
    %cst = arith.constant dense<0.000000e+00> : vector<2x512xf32>
    %2 = tpu.matmul %0, %1, %cst {dimension_numbers = #tpu.dot_dimension_numbers<[1], [0], [0], [1], [0, 0, 1, 1], [], []>} : vector<2x32xf32>, vector<32x512xf32>, vector<2x512xf32> -> vector<2x512xf32>
    %c0_3 = arith.constant 0 : index
    %c0_4 = arith.constant 0 : index
    %3 = vector.load %arg3[%c0_3, %c0_4] : memref<1x512xf32, #tpu.memory_space<vmem>>, vector<1x512xf32>
    %4 = vector.broadcast %3 : vector<1x512xf32> to vector<2x512xf32>
    %5 = arith.addf %2, %4 : vector<2x512xf32>
    %cst_5 = arith.constant 0.000000e+00 : f32
    %6 = vector.broadcast %cst_5 : f32 to vector<2x512xf32>
    %7 = arith.maximumf %5, %6 : vector<2x512xf32>
    %c0_6 = arith.constant 0 : index
    %c0_7 = arith.constant 0 : index
    %8 = vector.load %arg4[%c0_6, %c0_7] : memref<2x512xf32, #tpu.memory_space<vmem>>, vector<2x512xf32>
    tpu.vector_store %arg4[%c0_6, %c0_7], %7 {strides = array<i32>} : memref<2x512xf32, #tpu.memory_space<vmem>>, vector<2x512xf32>,
    return
  }
  func.func @transform_0(%arg0: i32) -> (i32, i32) {
    %c0_i32 = arith.constant 0 : i32
    %c0_i32_0 = arith.constant 0 : i32
    %c0_i32_1 = arith.constant 0 : i32
    return %c0_i32, %c0_i32_0 : i32, i32
  }
  func.func @transform_1(%arg0: i32) -> (i32, i32) {
    %c0_i32 = arith.constant 0 : i32
    %c0_i32_0 = arith.constant 0 : i32
    return %c0_i32, %arg0 : i32, i32
  }
  func.func @transform_2(%arg0: i32) -> (i32, i32) {
    %c0_i32 = arith.constant 0 : i32
    %c0_i32_0 = arith.constant 0 : i32
    return %c0_i32, %arg0 : i32, i32
  }
  func.func @transform_3(%arg0: i32) -> (i32, i32) {
    %c0_i32 = arith.constant 0 : i32
    %c0_i32_0 = arith.constant 0 : i32
    return %c0_i32, %arg0 : i32, i32
  }
}

module attributes {stable_mosaic.version = 11 : i64} {
  func.func @_fused_convt_kernel(%arg0: i32, %arg1: i32, %arg2: memref<1x128x4xf32, #tpu.memory_space<vmem>>, %arg3: memref<1x1x128x1xf32, #tpu.memory_space<vmem>>, %arg4: memref<1x1x128x1xf32, #tpu.memory_space<vmem>>, %arg5: memref<256x128xf32, #tpu.memory_space<vmem>>, %arg6: memref<128x1xf32, #tpu.memory_space<vmem>>, %arg7: memref<8x128xf32, #tpu.memory_space<vmem>>, %arg8: memref<4x1xf32, #tpu.memory_space<vmem>>, %arg9: memref<1x4x4xf32, #tpu.memory_space<vmem>>) attributes {dimension_semantics = [#tpu.dimension_semantics<parallel>, #tpu.dimension_semantics<parallel>], iteration_bounds = array<i64: 2, 1>, scalar_prefetch = 0 : i64, scratch_operands = 0 : i64, tpu.core_type = #tpu.core_type<tc>, window_params = [{transform_indices = @transform_0, window_bounds = array<i64: 1, 128, 4>}, {transform_indices = @transform_1, window_bounds = array<i64: 1, 1, 128, 1>}, {transform_indices = @transform_2, window_bounds = array<i64: 1, 1, 128, 1>}, {pipeline_mode = #tpu.pipeline_mode<synchronous>, transform_indices = @transform_3, window_bounds = array<i64: 256, 128>}, {pipeline_mode = #tpu.pipeline_mode<synchronous>, transform_indices = @transform_4, window_bounds = array<i64: 128, 1>}, {pipeline_mode = #tpu.pipeline_mode<synchronous>, transform_indices = @transform_5, window_bounds = array<i64: 8, 128>}, {pipeline_mode = #tpu.pipeline_mode<synchronous>, transform_indices = @transform_6, window_bounds = array<i64: 4, 1>}, {transform_indices = @transform_7, window_bounds = array<i64: 1, 4, 4>}]} {
    %c0 = arith.constant 0 : index
    %c0_0 = arith.constant 0 : index
    %c0_1 = arith.constant 0 : index
    %c0_2 = arith.constant 0 : index
    %0 = vector.load %arg3[%c0, %c0_0, %c0_1, %c0_2] : memref<1x1x128x1xf32, #tpu.memory_space<vmem>>, vector<1x1x128x1xf32>
    %1 = vector.shape_cast %0 : vector<1x1x128x1xf32> to vector<128x1xf32>
    %c0_3 = arith.constant 0 : index
    %c0_4 = arith.constant 0 : index
    %c0_5 = arith.constant 0 : index
    %2 = vector.load %arg2[%c0_3, %c0_4, %c0_5] : memref<1x128x4xf32, #tpu.memory_space<vmem>>, vector<1x128x4xf32>
    %3 = vector.shape_cast %2 : vector<1x128x4xf32> to vector<128x4xf32>
    %c0_6 = arith.constant 0 : index
    %c0_7 = arith.constant 0 : index
    %c0_8 = arith.constant 0 : index
    %c0_9 = arith.constant 0 : index
    %4 = vector.load %arg4[%c0_6, %c0_7, %c0_8, %c0_9] : memref<1x1x128x1xf32, #tpu.memory_space<vmem>>, vector<1x1x128x1xf32>
    %5 = vector.shape_cast %4 : vector<1x1x128x1xf32> to vector<128x1xf32>
    %6 = tpu.concatenate %1, %3, %5 in 1 : vector<128x1xf32>, vector<128x4xf32>, vector<128x1xf32> -> vector<128x6xf32>
    %c0_10 = arith.constant 0 : index
    %c0_11 = arith.constant 0 : index
    %7 = vector.load %arg5[%c0_10, %c0_11] : memref<256x128xf32, #tpu.memory_space<vmem>>, vector<256x128xf32>
    %cst = arith.constant dense<0.000000e+00> : vector<256x6xf32>
    %8 = tpu.matmul %7, %6, %cst {dimension_numbers = #tpu.dot_dimension_numbers<[1], [0], [0], [1], [0, 0, 1, 1], [], []>} : vector<256x128xf32>, vector<128x6xf32>, vector<256x6xf32> -> vector<256x6xf32>
    %9 = vector.extract_strided_slice %8 {offsets = [0, 0], sizes = [128, 5], strides = [1, 1]} : vector<256x6xf32> to vector<128x5xf32>
    %10 = vector.extract_strided_slice %8 {offsets = [128, 1], sizes = [128, 5], strides = [1, 1]} : vector<256x6xf32> to vector<128x5xf32>
    %11 = arith.addf %9, %10 : vector<128x5xf32>
    %c0_12 = arith.constant 0 : index
    %c0_13 = arith.constant 0 : index
    %12 = vector.load %arg6[%c0_12, %c0_13] : memref<128x1xf32, #tpu.memory_space<vmem>>, vector<128x1xf32>
    %13 = vector.broadcast %12 : vector<128x1xf32> to vector<128x5xf32>
    %14 = arith.addf %11, %13 : vector<128x5xf32>
    %cst_14 = arith.constant 0.000000e+00 : f32
    %15 = vector.broadcast %cst_14 : f32 to vector<128x5xf32>
    %16 = arith.maximumf %14, %15 : vector<128x5xf32>
    %17 = tpu.iota {dimensions = array<i32: 0>} : vector<128x5xi32>
    %18 = tpu.iota {dimensions = array<i32: 1>} : vector<128x5xi32>
    %c0_i32 = arith.constant 0 : i32
    %19 = arith.cmpi eq, %arg1, %c0_i32 : i32
    %c0_i32_15 = arith.constant 0 : i32
    %20 = vector.broadcast %c0_i32_15 : i32 to vector<128x5xi32>
    %21 = arith.cmpi eq, %18, %20 : vector<128x5xi32>
    %22 = vector.broadcast %19 : i1 to vector<128x5xi1>
    %23 = arith.andi %22, %21 : vector<128x5xi1>
    %c64_i32 = arith.constant 64 : i32
    %24 = vector.broadcast %c64_i32 : i32 to vector<128x5xi32>
    %25 = arith.cmpi sge, %17, %24 : vector<128x5xi32>
    %26 = arith.andi %23, %25 : vector<128x5xi1>
    %cst_16 = arith.constant 0.000000e+00 : f32
    %27 = vector.broadcast %cst_16 : f32 to vector<128x5xf32>
    %28 = arith.select %26, %27, %16 : vector<128x5xi1>, vector<128x5xf32>
    %c0_i32_17 = arith.constant 0 : i32
    %29 = arith.cmpi eq, %arg1, %c0_i32_17 : i32
    %c4_i32 = arith.constant 4 : i32
    %30 = vector.broadcast %c4_i32 : i32 to vector<128x5xi32>
    %31 = arith.cmpi eq, %18, %30 : vector<128x5xi32>
    %32 = vector.broadcast %29 : i1 to vector<128x5xi1>
    %33 = arith.andi %32, %31 : vector<128x5xi1>
    %c64_i32_18 = arith.constant 64 : i32
    %34 = vector.broadcast %c64_i32_18 : i32 to vector<128x5xi32>
    %35 = arith.cmpi slt, %17, %34 : vector<128x5xi32>
    %36 = arith.andi %33, %35 : vector<128x5xi1>
    %cst_19 = arith.constant 0.000000e+00 : f32
    %37 = vector.broadcast %cst_19 : f32 to vector<128x5xf32>
    %38 = arith.select %36, %37, %28 : vector<128x5xi1>, vector<128x5xf32>
    %c0_20 = arith.constant 0 : index
    %c0_21 = arith.constant 0 : index
    %39 = vector.load %arg7[%c0_20, %c0_21] : memref<8x128xf32, #tpu.memory_space<vmem>>, vector<8x128xf32>
    %cst_22 = arith.constant dense<0.000000e+00> : vector<8x5xf32>
    %40 = tpu.matmul %39, %38, %cst_22 {dimension_numbers = #tpu.dot_dimension_numbers<[1], [0], [0], [1], [0, 0, 1, 1], [], []>} : vector<8x128xf32>, vector<128x5xf32>, vector<8x5xf32> -> vector<8x5xf32>
    %41 = vector.extract_strided_slice %40 {offsets = [0, 0], sizes = [4, 4], strides = [1, 1]} : vector<8x5xf32> to vector<4x4xf32>
    %42 = vector.extract_strided_slice %40 {offsets = [4, 1], sizes = [4, 4], strides = [1, 1]} : vector<8x5xf32> to vector<4x4xf32>
    %43 = arith.addf %41, %42 : vector<4x4xf32>
    %c0_23 = arith.constant 0 : index
    %c0_24 = arith.constant 0 : index
    %44 = vector.load %arg8[%c0_23, %c0_24] : memref<4x1xf32, #tpu.memory_space<vmem>>, vector<4x1xf32>
    %45 = vector.broadcast %44 : vector<4x1xf32> to vector<4x4xf32>
    %46 = arith.addf %43, %45 : vector<4x4xf32>
    %47 = math.tanh %46 : vector<4x4xf32>
    %c0_25 = arith.constant 0 : index
    %c0_26 = arith.constant 0 : index
    %c0_27 = arith.constant 0 : index
    %48 = vector.load %arg9[%c0_25, %c0_26, %c0_27] : memref<1x4x4xf32, #tpu.memory_space<vmem>>, vector<1x4x4xf32>
    %49 = vector.shape_cast %48 : vector<1x4x4xf32> to vector<4x4xf32>
    %50 = vector.shape_cast %47 : vector<4x4xf32> to vector<1x4x4xf32>
    tpu.vector_store %arg9[%c0_25, %c0_26, %c0_27], %50 {strides = array<i32>} : memref<1x4x4xf32, #tpu.memory_space<vmem>>, vector<1x4x4xf32>,
    return
  }
  func.func @transform_0(%arg0: i32, %arg1: i32) -> (i32, i32, i32) {
    %c0_i32 = arith.constant 0 : i32
    %c0_i32_0 = arith.constant 0 : i32
    return %arg0, %c0_i32, %arg1 : i32, i32, i32
  }
  func.func @transform_1(%arg0: i32, %arg1: i32) -> (i32, i32, i32, i32) {
    %c0_i32 = arith.constant 0 : i32
    %c0_i32_0 = arith.constant 0 : i32
    %c0_i32_1 = arith.constant 0 : i32
    return %arg0, %arg1, %c0_i32, %c0_i32_0 : i32, i32, i32, i32
  }
  func.func @transform_2(%arg0: i32, %arg1: i32) -> (i32, i32, i32, i32) {
    %c0_i32 = arith.constant 0 : i32
    %c0_i32_0 = arith.constant 0 : i32
    %c0_i32_1 = arith.constant 0 : i32
    return %arg0, %arg1, %c0_i32, %c0_i32_0 : i32, i32, i32, i32
  }
  func.func @transform_3(%arg0: i32, %arg1: i32) -> (i32, i32) {
    %c0_i32 = arith.constant 0 : i32
    %c0_i32_0 = arith.constant 0 : i32
    %c0_i32_1 = arith.constant 0 : i32
    return %c0_i32, %c0_i32_0 : i32, i32
  }
  func.func @transform_4(%arg0: i32, %arg1: i32) -> (i32, i32) {
    %c0_i32 = arith.constant 0 : i32
    %c0_i32_0 = arith.constant 0 : i32
    %c0_i32_1 = arith.constant 0 : i32
    return %c0_i32, %c0_i32_0 : i32, i32
  }
  func.func @transform_5(%arg0: i32, %arg1: i32) -> (i32, i32) {
    %c0_i32 = arith.constant 0 : i32
    %c0_i32_0 = arith.constant 0 : i32
    %c0_i32_1 = arith.constant 0 : i32
    return %c0_i32, %c0_i32_0 : i32, i32
  }
  func.func @transform_6(%arg0: i32, %arg1: i32) -> (i32, i32) {
    %c0_i32 = arith.constant 0 : i32
    %c0_i32_0 = arith.constant 0 : i32
    %c0_i32_1 = arith.constant 0 : i32
    return %c0_i32, %c0_i32_0 : i32, i32
  }
  func.func @transform_7(%arg0: i32, %arg1: i32) -> (i32, i32, i32) {
    %c0_i32 = arith.constant 0 : i32
    %c0_i32_0 = arith.constant 0 : i32
    return %arg0, %c0_i32, %arg1 : i32, i32, i32
  }
}

</mosaic_0001>

<llo_original>
// kernel: audio_decoder_forward.2
$region0: #{audio_decoder_forward.2}
  #allocation0 [shape = 'u32[]', space=smem, size = 0x4, offset = 0x4, fixed_abs, tag = 'smem constant byte address 0x4 - core index']
  #allocation1 [shape = 'u32[144,128]{1,0:T(1,128)}', space=vmem, size = 0x12000, scoped, tag = 'internal scratch']
  %s0 = inlined_call_operand.vmem [shape: f32[2,32], index: 0, kind: input, shape index: {}]
  %s1 = inlined_call_operand.hbm [shape: f32[32,512], index: 1, kind: input, shape index: {}]
  %s2 = inlined_call_operand.vmem [shape: f32[1,512], index: 2, kind: input, shape index: {}]
  %s3 = inlined_call_operand.vmem [shape: f32[2,512], index: 3, kind: output, shape index: {}]
  %s4 = sld [smem:[#allocation0]]
  $region26: #{audio_decoder_forward.2} parent=0
    _
  %s6 = ssub.s32 1, %s4
  %s7 = scalar_select 0, %s6, %s4
  $region1: #{audio_decoder_forward.2} parent=0
    #allocation2 [shape = 'u8[65536]{0}', space=vmem, size = 0x10000, scoped, tag = 'input window, operand 1, single buffered']
    #allocation3 [shape = 's32[1]{0}', space=sflag, size = 0x4, scoped, tag = 'scoped memory for audio_decoder_forward.2']
    %8 = vsyncpa [#allocation3], 0
    // Predicated region
    $region2: #{audio_decoder_forward.2} parent=1 // pred_check
      _
    $region3: #{audio_decoder_forward.2} parent=1 // pred_check_branch
      %10 = sbr.rel (0) target = $region5
    $region4: #{audio_decoder_forward.2} parent=1 // pred_region
      _
    $region5: #{audio_decoder_forward.2} parent=1 // pred_fallthru
      _
    // Predicated region
    $region6: #{audio_decoder_forward.2} parent=1 // pred_check
      _
    $region7: #{audio_decoder_forward.2} parent=1 // pred_check_branch
      %12 = sbr.rel (0) target = $region9
    $region8: #{audio_decoder_forward.2} parent=1 // pred_region
      %s14 = ssub.s32 2048, 2048
      %15 = vsyncadd [#allocation3], %s14
      %s16 = sshll.u32 [#allocation2], 4
      %s17 = int_to_ptr.vmem [resolvable:$true] %s16
      %22 = dma.hbm_to_vmem [thread:$0]  %s1, 2048, %s17, [#allocation3], 512, 512, 32
    $region9: #{audio_decoder_forward.2} parent=1 // pred_fallthru
      _
    // Predicated region
    $region10: #{audio_decoder_forward.2} parent=1 // pred_check
      _
    $region11: #{audio_decoder_forward.2} parent=1 // pred_check_branch
      %24 = sbr.rel (0) target = $region13
    $region12: #{audio_decoder_forward.2} parent=1 // pred_region
      _
    $region13: #{audio_decoder_forward.2} parent=1 // pred_fallthru
      _
    // Predicated region
    $region14: #{audio_decoder_forward.2} parent=1 // pred_check
      _
    $region15: #{audio_decoder_forward.2} parent=1 // pred_check_branch
      %26 = sbr.rel (0) target = $region17
    $region16: #{audio_decoder_forward.2} parent=1 // pred_region
      %27 = dma.done [#allocation3], 2048
    $region17: #{audio_decoder_forward.2} parent=1 // pred_fallthru
      _
    %v28 = vld [vmem:[%s0] sm:$0x3]
    %v29 = vld [vmem:[#allocation2] sm:$0xff]
    %v30 = vld [vmem:[#allocation2 + $0x8] sm:$0xff]
    %v31 = vld [vmem:[#allocation2 + $0x10] sm:$0xff]
    %v32 = vld [vmem:[#allocation2 + $0x18] sm:$0xff]
    %v33 = vld [vmem:[#allocation2 + $0x20] sm:$0xff]
    %v34 = vld [vmem:[#allocation2 + $0x28] sm:$0xff]
    %v35 = vld [vmem:[#allocation2 + $0x30] sm:$0xff]
    %v36 = vld [vmem:[#allocation2 + $0x38] sm:$0xff]
    %v37 = vld [vmem:[#allocation2 + $0x40] sm:$0xff]
    %v38 = vld [vmem:[#allocation2 + $0x48] sm:$0xff]
    %v39 = vld [vmem:[#allocation2 + $0x50] sm:$0xff]
    %v40 = vld [vmem:[#allocation2 + $0x58] sm:$0xff]
    %v41 = vld [vmem:[#allocation2 + $0x60] sm:$0xff]
    %v42 = vld [vmem:[#allocation2 + $0x68] sm:$0xff]
    %v43 = vld [vmem:[#allocation2 + $0x70] sm:$0xff]
    %v44 = vld [vmem:[#allocation2 + $0x78] sm:$0xff]
    %v45 = vld [vmem:[%s2] sm:$0xf]
    %v47 = vlaneseq
    %v48 = vshrl.u32 %v47, 7
    %v49 = vsub.s32 0, %v48
    %v50 = vrot.slane %v45, %v49
    %v51 = vlaneseq
    %v52 = vshrl.u32 %v51, 7
    %v53 = vsub.s32 1, %v52
    %v54 = vrot.slane %v45, %v53
    %v55 = vlaneseq
    %v56 = vshrl.u32 %v55, 7
    %v57 = vsub.s32 2, %v56
    %v58 = vrot.slane %v45, %v57
    %v59 = vlaneseq
    %v60 = vshrl.u32 %v59, 7
    %v61 = vsub.s32 3, %v60
    %v62 = vrot.slane %v45, %v61
    %vm67 = vcmask 261120
    %v69 = vsel %vm67, %v28, 0
    %71 = vmatprep.subr.mxu0 %v30
    %72 = vmatpush1.msra.mxu0 %v29
    %73 = vmatprep.subr.mxu0 %v34
    %74 = vmatpush1.msra.mxu0 %v33
    %75 = vmatprep.subr.mxu0 %v38
    %76 = vmatpush1.msra.mxu0 %v37
    %77 = vmatprep.subr.mxu0 %v42
    %78 = vmatpush1.msra.mxu0 %v41
    %79 = vmatprep.subr.mxu0 0.0
    %80 = vmatpush1.msra.mxu0 0.0
    %81 = vmatprep.subr.mxu0 0.0
    %82 = vmatpush1.msra.mxu0 0.0
    %83 = vmatprep.subr.mxu0 0.0
    %84 = vmatpush1.msra.mxu0 0.0
    %85 = vmatprep.subr.mxu0 0.0
    %86 = vmatpush1.msra.mxu0 0.0
    %87 = vmatprep.subr.mxu0 0.0
    %88 = vmatpush1.msra.mxu0 0.0
    %89 = vmatprep.subr.mxu0 0.0
    %90 = vmatpush1.msra.mxu0 0.0
    %91 = vmatprep.subr.mxu0 0.0
    %92 = vmatpush1.msra.mxu0 0.0
    %93 = vmatprep.subr.mxu0 0.0
    %94 = vmatpush1.msra.mxu0 0.0
    %95 = vmatprep.subr.mxu0 0.0
    %96 = vmatpush1.msra.mxu0 0.0
    %97 = vmatprep.subr.mxu0 0.0
    %98 = vmatpush1.msra.mxu0 0.0
    %99 = vmatprep.subr.mxu0 0.0
    %100 = vmatpush1.msra.mxu0 0.0
    %101 = vmatprep.subr.mxu0 0.0
    %102 = vmatpush1.msra.mxu0 0.0
    %103 = vmatprep.subr.mxu0 0.0
    %104 = vmatpush1.msra.mxu0 0.0
    %105 = vmatprep.subr.mxu0 0.0
    %106 = vmatpush1.msra.mxu0 0.0
    %107 = vmatprep.subr.mxu0 0.0
    %108 = vmatpush1.msra.mxu0 0.0
    %109 = vmatprep.subr.mxu0 0.0
    %110 = vmatpush1.msra.mxu0 0.0
    %111 = vmatprep.subr.mxu0 0.0
    %112 = vmatpush1.msra.mxu0 0.0
    %113 = vmatprep.subr.mxu0 0.0
    %114 = vmatpush1.msra.mxu0 0.0
    %115 = vmatprep.subr.mxu0 0.0
    %116 = vmatpush1.msra.mxu0 0.0
    %117 = vmatprep.subr.mxu0 0.0
    %118 = vmatpush1.msra.mxu0 0.0
    %119 = vmatprep.subr.mxu0 0.0
    %120 = vmatpush1.msra.mxu0 0.0
    %121 = vmatprep.subr.mxu0 0.0
    %122 = vmatpush1.msra.mxu0 0.0
    %123 = vmatprep.subr.mxu0 0.0
    %124 = vmatpush1.msra.mxu0 0.0
    %125 = vmatprep.subr.mxu0 0.0
    %126 = vmatpush1.msra.mxu0 0.0
    %127 = vmatprep.subr.mxu0 0.0
    %128 = vmatpush1.msra.mxu0 0.0
    %129 = vmatprep.subr.mxu0 0.0
    %130 = vmatpush1.msra.mxu0 0.0
    %131 = vmatprep.subr.mxu0 0.0
    %132 = vmatpush1.msra.mxu0 0.0
    %133 = vmatprep.subr.mxu0 0.0
    %134 = vmatpush1.msra.mxu0 0.0
    %135 = vmatprep.mubr.f32.mxu0 0.0
    %136 = vmatmul.mubr.f32.gmra.mrb[0].mxu0 %v69
    %v137 = vpop.f32.mrb[0].mxu0
    %v138 = vadd.f32 %v50, %v137
    %v139 = vpop.f32.mrb[0].mxu0
    %v140 = vadd.f32 %v54, %v139
    %141 = vdwg.mxu0
    %142 = vmatprep.subr.mxu0 %v32
    %143 = vmatpush1.msra.mxu0 %v31
    %144 = vmatprep.subr.mxu0 %v36
    %145 = vmatpush1.msra.mxu0 %v35
    %146 = vmatprep.subr.mxu0 %v40
    %147 = vmatpush1.msra.mxu0 %v39
    %148 = vmatprep.subr.mxu0 %v44
    %149 = vmatpush1.msra.mxu0 %v43
    %150 = vmatprep.subr.mxu0 0.0
    %151 = vmatpush1.msra.mxu0 0.0
    %152 = vmatprep.subr.mxu0 0.0
    %153 = vmatpush1.msra.mxu0 0.0
    %154 = vmatprep.subr.mxu0 0.0
    %155 = vmatpush1.msra.mxu0 0.0
    %156 = vmatprep.subr.mxu0 0.0
    %157 = vmatpush1.msra.mxu0 0.0
    %158 = vmatprep.subr.mxu0 0.0
    %159 = vmatpush1.msra.mxu0 0.0
    %160 = vmatprep.subr.mxu0 0.0
    %161 = vmatpush1.msra.mxu0 0.0
    %162 = vmatprep.subr.mxu0 0.0
    %163 = vmatpush1.msra.mxu0 0.0
    %164 = vmatprep.subr.mxu0 0.0
    %165 = vmatpush1.msra.mxu0 0.0
    %166 = vmatprep.subr.mxu0 0.0
    %167 = vmatpush1.msra.mxu0 0.0
    %168 = vmatprep.subr.mxu0 0.0
    %169 = vmatpush1.msra.mxu0 0.0
    %170 = vmatprep.subr.mxu0 0.0
    %171 = vmatpush1.msra.mxu0 0.0
    %172 = vmatprep.subr.mxu0 0.0
    %173 = vmatpush1.msra.mxu0 0.0
    %174 = vmatprep.subr.mxu0 0.0
    %175 = vmatpush1.msra.mxu0 0.0
    %176 = vmatprep.subr.mxu0 0.0
    %177 = vmatpush1.msra.mxu0 0.0
    %178 = vmatprep.subr.mxu0 0.0
    %179 = vmatpush1.msra.mxu0 0.0
    %180 = vmatprep.subr.mxu0 0.0
    %181 = vmatpush1.msra.mxu0 0.0
    %182 = vmatprep.subr.mxu0 0.0
    %183 = vmatpush1.msra.mxu0 0.0
    %184 = vmatprep.subr.mxu0 0.0
    %185 = vmatpush1.msra.mxu0 0.0
    %186 = vmatprep.subr.mxu0 0.0
    %187 = vmatpush1.msra.mxu0 0.0
    %188 = vmatprep.subr.mxu0 0.0
    %189 = vmatpush1.msra.mxu0 0.0
    %190 = vmatprep.subr.mxu0 0.0
    %191 = vmatpush1.msra.mxu0 0.0
    %192 = vmatprep.subr.mxu0 0.0
    %193 = vmatpush1.msra.mxu0 0.0
    %194 = vmatprep.subr.mxu0 0.0
    %195 = vmatpush1.msra.mxu0 0.0
    %196 = vmatprep.subr.mxu0 0.0
    %197 = vmatpush1.msra.mxu0 0.0
    %198 = vmatprep.subr.mxu0 0.0
    %199 = vmatpush1.msra.mxu0 0.0
    %200 = vmatprep.subr.mxu0 0.0
    %201 = vmatpush1.msra.mxu0 0.0
    %202 = vmatprep.subr.mxu0 0.0
    %203 = vmatpush1.msra.mxu0 0.0
    %204 = vmatprep.subr.mxu0 0.0
    %205 = vmatpush1.msra.mxu0 0.0
    %206 = vmatprep.mubr.f32.mxu0 0.0
    %207 = vmatmul.mubr.f32.gmra.mrb[0].mxu0 %v69
    %v208 = vpop.f32.mrb[0].mxu0
    %v209 = vadd.f32 %v58, %v208
    %v210 = vpop.f32.mrb[0].mxu0
    %v211 = vadd.f32 %v62, %v210
    %212 = vdwg.mxu0
    %v213 = vmax.f32 %v138, 0.0
    %v214 = vmax.f32 %v140, 0.0
    %v215 = vmax.f32 %v209, 0.0
    %v216 = vmax.f32 %v211, 0.0
    %v221 = vcombine.low %v213, %v214
    %v222 = vcombine.low %v215, %v216
    %v224 = vunpack.c.l.s4 1983009808
    %v225 = vunpack.c.0.s8 %v224
    %v226 = vlaneseq
    %v227 = vshrl.u32 %v226, 7
    %v228 = vsub.s32 %v225, %v227
    %v229 = vrot.slane %v221, %v228
    %v231 = vunpack.c.l.s4 1983009808
    %v232 = vunpack.c.0.s8 %v231
    %v233 = vlaneseq
    %v234 = vshrl.u32 %v233, 7
    %v235 = vsub.s32 %v232, %v234
    %v236 = vrot.slane %v222, %v235
    %v237 = vcombine.low %v229, %v236
    %239 = vst [vmem:[%s3] sm:$0xff] %v237
    // Predicated region
    $region18: #{audio_decoder_forward.2} parent=1 // pred_check
      _
    $region19: #{audio_decoder_forward.2} parent=1 // pred_check_branch
      %241 = sbr.rel (0) target = $region21
    $region20: #{audio_decoder_forward.2} parent=1 // pred_region
      _
    $region21: #{audio_decoder_forward.2} parent=1 // pred_fallthru
      _
    // Predicated region
    $region22: #{audio_decoder_forward.2} parent=1 // pred_check
      _
    $region23: #{audio_decoder_forward.2} parent=1 // pred_check_branch
      %243 = sbr.rel (0) target = $region25
    $region24: #{audio_decoder_forward.2} parent=1 // pred_region
      _
    $region25: #{audio_decoder_forward.2} parent=1 // pred_fallthru
      _
    %244 = vsyncpa [#allocation3], 1

// kernel: audio_decoder_forward.3
$region0: #{audio_decoder_forward.3}
  #allocation0 [shape = 'u32[]', space=smem, size = 0x4, offset = 0x4, fixed_abs, tag = 'smem constant byte address 0x4 - core index']
  #allocation1 [shape = 'u32[144,128]{1,0:T(1,128)}', space=vmem, size = 0x12000, scoped, tag = 'internal scratch']
  %s0 = inlined_call_operand.vmem [shape: f32[2,128,4], index: 0, kind: input, shape index: {}]
  %s1 = inlined_call_operand.vmem [shape: f32[2,1,128,1], index: 1, kind: input, shape index: {}, may-alias: {1,2}]
  %s2 = inlined_call_operand.vmem [shape: f32[2,1,128,1], index: 2, kind: input, shape index: {}, may-alias: {1,2}]
  %s3 = inlined_call_operand.vmem [shape: f32[256,128], index: 3, kind: input, shape index: {}]
  %s4 = inlined_call_operand.vmem [shape: f32[128,1], index: 4, kind: input, shape index: {}]
  %s5 = inlined_call_operand.vmem [shape: f32[8,128], index: 5, kind: input, shape index: {}]
  %s6 = inlined_call_operand.vmem [shape: f32[4,1], index: 6, kind: input, shape index: {}]
  %s7 = inlined_call_operand.vmem [shape: f32[2,4,4], index: 7, kind: output, shape index: {}]
  %s8 = sld [smem:[#allocation0]]
  $region61: #{audio_decoder_forward.3} parent=0
    _
  %s10 = ssub.s32 1, %s8
  %s11 = scalar_select 0, %s10, %s8
  loop: start=0, step=1, limit=4
  $region2: #{audio_decoder_forward.3} parent=0 // loop_pre_header
    _
  $region3: #{audio_decoder_forward.3} parent=0 // loop_header
    %s13 = sphi 0, %s17
    %p14 = scmp.ge.s32.totalorder %s13, 4
    %s20 = sphi 0, %s32
    %s21 = sphi 0, %s28
    %s22 = sphi 0, %s20
    %s23 = sphi 0, %s21
    %s24 = sphi 0, %s22
    %s25 = sphi 0, %s23
    %s37 = sphi 0, %s39
    %s40 = sphi 0, %s37
    %s41 = sphi 0, %s40
    %s57 = sphi 0, %s41
    %s65 = sphi 0, %s67
    %s68 = sphi 0, %s65
    %s69 = sphi 0, %s68
    %s85 = sphi 0, %s69
    %s93 = sphi 0, %s95
    %s96 = sphi 0, %s93
    %s97 = sphi 0, %s96
    %s113 = sphi 0, %s97
    %s117 = sphi 0, %s117
    %s119 = sphi 0, %s117
    %s120 = sphi 0, %s119
    %s134 = sphi 0, %s120
    %s138 = sphi 0, %s138
    %s140 = sphi 0, %s138
    %s141 = sphi 0, %s140
    %s155 = sphi 0, %s141
    %s159 = sphi 0, %s159
    %s161 = sphi 0, %s159
    %s162 = sphi 0, %s161
    %s176 = sphi 0, %s162
    %s180 = sphi 0, %s180
    %s182 = sphi 0, %s180
    %s183 = sphi 0, %s182
    %s197 = sphi 0, %s183
    %s205 = sphi 0, %s207
    %s208 = sphi 0, %s205
    %s209 = sphi 0, %s208
    %s225 = sphi 0, %s209
  $region4: #{audio_decoder_forward.3} parent=0 // loop_header_branch
    %16 = sbr.rel (%p14) target = $region8
  $region5: #{audio_decoder_forward.3} parent=0 // loop_body
    %s18 = ssub.s32 %s13, 1
    %s19 = ssub.s32 %s13, 2
    %s26 = sadd.s32 1, %s21
    %p27 = scmp.ge.s32.totalorder %s26, 1
    %s28 = scalar_select %p27, 0, %s26
    %s29 = sadd.s32 1, %s20
    %s30 = scalar_select %p27, %s29, %s20
    %p31 = scmp.ge.s32.totalorder %s30, 2
    %s32 = scalar_select %p31, 0, %s30
    %s33 = ssub.s32 %s20, %s32
    %s34 = ssub.s32 %s21, %s28
    %s35 = sor.u32 %s33, %s34
    %p36 = scmp.eq.s32.totalorder %s35, 0
    %s38 = sadd.s32 %s37, 1
    %s39 = scalar_select %p36, %s37, %s38
    %p42 = pneg %p36
    %p43 = scmp.eq.s32.totalorder %s13, 1
    %p44 = por %p42, %p43
    %p45 = scmp.ne.s32.totalorder %s37, %s40
    %p46 = scmp.eq.s32.totalorder %s13, 0
    %p47 = por %p45, %p46
    %p48 = scmp.ne.s32.totalorder %s37, %s40
    %p49 = scmp.eq.s32.totalorder %s18, 1
    %p50 = por %p48, %p49
    %p51 = scmp.ne.s32.totalorder %s40, %s41
    %p52 = scmp.eq.s32.totalorder %s18, 0
    %p53 = por %p51, %p52
    %p54 = scmp.ne.s32.totalorder %s40, %s41
    %p55 = scmp.eq.s32.totalorder %s19, 1
    %p56 = por %p54, %p55
    %p58 = scmp.ne.s32.totalorder %s41, %s57
    %p59 = scmp.eq.s32.totalorder %s19, 0
    %p60 = por %p58, %p59
    %s61 = ssub.s32 %s20, %s32
    %s62 = ssub.s32 %s21, %s28
    %s63 = sor.u32 %s61, %s62
    %p64 = scmp.eq.s32.totalorder %s63, 0
    %s66 = sadd.s32 %s65, 1
    %s67 = scalar_select %p64, %s65, %s66
    %p70 = pneg %p64
    %p71 = scmp.eq.s32.totalorder %s13, 1
    %p72 = por %p70, %p71
    %p73 = scmp.ne.s32.totalorder %s65, %s68
    %p74 = scmp.eq.s32.totalorder %s13, 0
    %p75 = por %p73, %p74
    %p76 = scmp.ne.s32.totalorder %s65, %s68
    %p77 = scmp.eq.s32.totalorder %s18, 1
    %p78 = por %p76, %p77
    %p79 = scmp.ne.s32.totalorder %s68, %s69
    %p80 = scmp.eq.s32.totalorder %s18, 0
    %p81 = por %p79, %p80
    %p82 = scmp.ne.s32.totalorder %s68, %s69
    %p83 = scmp.eq.s32.totalorder %s19, 1
    %p84 = por %p82, %p83
    %p86 = scmp.ne.s32.totalorder %s69, %s85
    %p87 = scmp.eq.s32.totalorder %s19, 0
    %p88 = por %p86, %p87
    %s89 = ssub.s32 %s20, %s32
    %s90 = ssub.s32 %s21, %s28
    %s91 = sor.u32 %s89, %s90
    %p92 = scmp.eq.s32.totalorder %s91, 0
    %s94 = sadd.s32 %s93, 1
    %s95 = scalar_select %p92, %s93, %s94
    %p98 = pneg %p92
    %p99 = scmp.eq.s32.totalorder %s13, 1
    %p100 = por %p98, %p99
    %p101 = scmp.ne.s32.totalorder %s93, %s96
    %p102 = scmp.eq.s32.totalorder %s13, 0
    %p103 = por %p101, %p102
    %p104 = scmp.ne.s32.totalorder %s93, %s96
    %p105 = scmp.eq.s32.totalorder %s18, 1
    %p106 = por %p104, %p105
    %p107 = scmp.ne.s32.totalorder %s96, %s97
    %p108 = scmp.eq.s32.totalorder %s18, 0
    %p109 = por %p107, %p108
    %p110 = scmp.ne.s32.totalorder %s96, %s97
    %p111 = scmp.eq.s32.totalorder %s19, 1
    %p112 = por %p110, %p111
    %p114 = scmp.ne.s32.totalorder %s97, %s113
    %p115 = scmp.eq.s32.totalorder %s19, 0
    %p116 = por %p114, %p115
    %s118 = sadd.s32 %s117, 1
    %p121 = scmp.eq.s32.totalorder %s13, 1
    %p122 = scmp.ne.s32.totalorder %s117, %s119
    %p123 = scmp.eq.s32.totalorder %s13, 0
    %p124 = por %p122, %p123
    %p125 = scmp.ne.s32.totalorder %s117, %s119
    %p126 = scmp.eq.s32.totalorder %s18, 1
    %p127 = por %p125, %p126
    %p128 = scmp.ne.s32.totalorder %s119, %s120
    %p129 = scmp.eq.s32.totalorder %s18, 0
    %p130 = por %p128, %p129
    %p131 = scmp.ne.s32.totalorder %s119, %s120
    %p132 = scmp.eq.s32.totalorder %s19, 1
    %p133 = por %p131, %p132
    %p135 = scmp.ne.s32.totalorder %s120, %s134
    %p136 = scmp.eq.s32.totalorder %s19, 0
    %p137 = por %p135, %p136
    %s139 = sadd.s32 %s138, 1
    %p142 = scmp.eq.s32.totalorder %s13, 1
    %p143 = scmp.ne.s32.totalorder %s138, %s140
    %p144 = scmp.eq.s32.totalorder %s13, 0
    %p145 = por %p143, %p144
    %p146 = scmp.ne.s32.totalorder %s138, %s140
    %p147 = scmp.eq.s32.totalorder %s18, 1
    %p148 = por %p146, %p147
    %p149 = scmp.ne.s32.totalorder %s140, %s141
    %p150 = scmp.eq.s32.totalorder %s18, 0
    %p151 = por %p149, %p150
    %p152 = scmp.ne.s32.totalorder %s140, %s141
    %p153 = scmp.eq.s32.totalorder %s19, 1
    %p154 = por %p152, %p153
    %p156 = scmp.ne.s32.totalorder %s141, %s155
    %p157 = scmp.eq.s32.totalorder %s19, 0
    %p158 = por %p156, %p157
    %s160 = sadd.s32 %s159, 1
    %p163 = scmp.eq.s32.totalorder %s13, 1
    %p164 = scmp.ne.s32.totalorder %s159, %s161
    %p165 = scmp.eq.s32.totalorder %s13, 0
    %p166 = por %p164, %p165
    %p167 = scmp.ne.s32.totalorder %s159, %s161
    %p168 = scmp.eq.s32.totalorder %s18, 1
    %p169 = por %p167, %p168
    %p170 = scmp.ne.s32.totalorder %s161, %s162
    %p171 = scmp.eq.s32.totalorder %s18, 0
    %p172 = por %p170, %p171
    %p173 = scmp.ne.s32.totalorder %s161, %s162
    %p174 = scmp.eq.s32.totalorder %s19, 1
    %p175 = por %p173, %p174
    %p177 = scmp.ne.s32.totalorder %s162, %s176
    %p178 = scmp.eq.s32.totalorder %s19, 0
    %p179 = por %p177, %p178
    %s181 = sadd.s32 %s180, 1
    %p184 = scmp.eq.s32.totalorder %s13, 1
    %p185 = scmp.ne.s32.totalorder %s180, %s182
    %p186 = scmp.eq.s32.totalorder %s13, 0
    %p187 = por %p185, %p186
    %p188 = scmp.ne.s32.totalorder %s180, %s182
    %p189 = scmp.eq.s32.totalorder %s18, 1
    %p190 = por %p188, %p189
    %p191 = scmp.ne.s32.totalorder %s182, %s183
    %p192 = scmp.eq.s32.totalorder %s18, 0
    %p193 = por %p191, %p192
    %p194 = scmp.ne.s32.totalorder %s182, %s183
    %p195 = scmp.eq.s32.totalorder %s19, 1
    %p196 = por %p194, %p195
    %p198 = scmp.ne.s32.totalorder %s183, %s197
    %p199 = scmp.eq.s32.totalorder %s19, 0
    %p200 = por %p198, %p199
    %s201 = ssub.s32 %s20, %s32
    %s202 = ssub.s32 %s21, %s28
    %s203 = sor.u32 %s201, %s202
    %p204 = scmp.eq.s32.totalorder %s203, 0
    %s206 = sadd.s32 %s205, 1
    %s207 = scalar_select %p204, %s205, %s206
    %p210 = pneg %p204
    %p211 = scmp.eq.s32.totalorder %s13, 1
    %p212 = por %p210, %p211
    %p213 = scmp.ne.s32.totalorder %s205, %s208
    %p214 = scmp.eq.s32.totalorder %s13, 0
    %p215 = por %p213, %p214
    %p216 = scmp.ne.s32.totalorder %s205, %s208
    %p217 = scmp.eq.s32.totalorder %s18, 1
    %p218 = por %p216, %p217
    %p219 = scmp.ne.s32.totalorder %s208, %s209
    %p220 = scmp.eq.s32.totalorder %s18, 0
    %p221 = por %p219, %p220
    %p222 = scmp.ne.s32.totalorder %s208, %s209
    %p223 = scmp.eq.s32.totalorder %s19, 1
    %p224 = por %p222, %p223
    %p226 = scmp.ne.s32.totalorder %s209, %s225
    %p227 = scmp.eq.s32.totalorder %s19, 0
    %p228 = por %p226, %p227
    %p229 = scmp.le.s32.totalorder 1, %s13
    %p230 = scmp.lt.s32.totalorder %s13, 3
    %p231 = pnand %p229, %p230
    %p232 = pneg %p231
    // Predicated region
    $region9: #{audio_decoder_forward.3} parent=5 // pred_check
      _
    $region10: #{audio_decoder_forward.3} parent=5 // pred_check_branch
      %234 = sbr.rel (%p231) target = $region12
    $region11: #{audio_decoder_forward.3} parent=5 // pred_region
      %s235 = ssub.s32 %s13, 1
      // Predicated region
      $region13: #{audio_decoder_forward.3} parent=11 // pred_check
        %p236 = pneg %p130
      $region14: #{audio_decoder_forward.3} parent=11 // pred_check_branch
        %238 = sbr.rel (%p236) target = $region16
      $region15: #{audio_decoder_forward.3} parent=11 // pred_region
        _
      $region16: #{audio_decoder_forward.3} parent=11 // pred_fallthru
        _
      // Predicated region
      $region17: #{audio_decoder_forward.3} parent=11 // pred_check
        %p239 = pneg %p151
      $region18: #{audio_decoder_forward.3} parent=11 // pred_check_branch
        %241 = sbr.rel (%p239) target = $region20
      $region19: #{audio_decoder_forward.3} parent=11 // pred_region
        _
      $region20: #{audio_decoder_forward.3} parent=11 // pred_fallthru
        _
      // Predicated region
      $region21: #{audio_decoder_forward.3} parent=11 // pred_check
        %p242 = pneg %p172
      $region22: #{audio_decoder_forward.3} parent=11 // pred_check_branch
        %244 = sbr.rel (%p242) target = $region24
      $region23: #{audio_decoder_forward.3} parent=11 // pred_region
        _
      $region24: #{audio_decoder_forward.3} parent=11 // pred_fallthru
        _
      // Predicated region
      $region25: #{audio_decoder_forward.3} parent=11 // pred_check
        %p245 = pneg %p193
      $region26: #{audio_decoder_forward.3} parent=11 // pred_check_branch
        %247 = sbr.rel (%p245) target = $region28
      $region27: #{audio_decoder_forward.3} parent=11 // pred_region
        _
      $region28: #{audio_decoder_forward.3} parent=11 // pred_fallthru
        _
    $region12: #{audio_decoder_forward.3} parent=5 // pred_fallthru
      _
    %p248 = scmp.lt.s32.totalorder %s13, 2
    // Predicated region
    $region29: #{audio_decoder_forward.3} parent=5 // pred_check
      %p249 = pneg %p248
    $region30: #{audio_decoder_forward.3} parent=5 // pred_check_branch
      %251 = sbr.rel (%p249) target = $region32
    $region31: #{audio_decoder_forward.3} parent=5 // pred_region
      // Predicated region
      $region33: #{audio_decoder_forward.3} parent=31 // pred_check
        %p252 = pneg %p47
      $region34: #{audio_decoder_forward.3} parent=31 // pred_check_branch
        %254 = sbr.rel (%p252) target = $region36
      $region35: #{audio_decoder_forward.3} parent=31 // pred_region
        %p255 = scmp.lt.s32.totalorder %s20, 1
        %s256 = scalar_select %p255, %s20, 1
        %p257 = scmp.lt.s32.totalorder %s21, 0
        %s258 = scalar_select %p257, %s21, 0
        %s259 = smul.addr %s256, 16
        %s260 = sadd.s32 %s258, %s259
        %s261 = smul.addr %s260, 8
        %s262 = scalar_lea.vmem %s0, %s261
      $region36: #{audio_decoder_forward.3} parent=31 // pred_fallthru
        _
      // Predicated region
      $region37: #{audio_decoder_forward.3} parent=31 // pred_check
        %p263 = pneg %p75
      $region38: #{audio_decoder_forward.3} parent=31 // pred_check_branch
        %265 = sbr.rel (%p263) target = $region40
      $region39: #{audio_decoder_forward.3} parent=31 // pred_region
        %p266 = scmp.lt.s32.totalorder %s20, 1
        %s267 = scalar_select %p266, %s20, 1
        %p268 = scmp.lt.s32.totalorder %s21, 0
        %s269 = scalar_select %p268, %s21, 0
        %s270 = smul.addr %s269, 16
        %s271 = smul.addr %s267, 16
        %s272 = sadd.s32 %s270, %s271
        %s273 = smul.addr %s272, 8
        %s274 = scalar_lea.vmem %s1, %s273
      $region40: #{audio_decoder_forward.3} parent=31 // pred_fallthru
        _
      // Predicated region
      $region41: #{audio_decoder_forward.3} parent=31 // pred_check
        %p275 = pneg %p103
      $region42: #{audio_decoder_forward.3} parent=31 // pred_check_branch
        %277 = sbr.rel (%p275) target = $region44
      $region43: #{audio_decoder_forward.3} parent=31 // pred_region
        %p278 = scmp.lt.s32.totalorder %s20, 1
        %s279 = scalar_select %p278, %s20, 1
        %p280 = scmp.lt.s32.totalorder %s21, 0
        %s281 = scalar_select %p280, %s21, 0
        %s282 = smul.addr %s281, 16
        %s283 = smul.addr %s279, 16
        %s284 = sadd.s32 %s282, %s283
        %s285 = smul.addr %s284, 8
        %s286 = scalar_lea.vmem %s2, %s285
      $region44: #{audio_decoder_forward.3} parent=31 // pred_fallthru
        _
    $region32: #{audio_decoder_forward.3} parent=5 // pred_fallthru
      _
    %p287 = scmp.le.s32.totalorder 1, %s13
    %p288 = scmp.lt.s32.totalorder %s13, 3
    %p289 = pnand %p287, %p288
    %p290 = pneg %p289
    // Predicated region
    $region45: #{audio_decoder_forward.3} parent=5 // pred_check
      _
    $region46: #{audio_decoder_forward.3} parent=5 // pred_check_branch
      %292 = sbr.rel (%p289) target = $region48
    $region47: #{audio_decoder_forward.3} parent=5 // pred_region
      %s293 = ssub.s32 %s13, 1
      %p294 = scmp.lt.s32.totalorder %s22, 1
      %s295 = scalar_select %p294, %s22, 1
      %p296 = scmp.lt.s32.totalorder %s23, 0
      %s297 = scalar_select %p296, %s23, 0
      %s298 = smul.addr %s295, 16
      %s299 = sadd.s32 %s297, %s298
      %s300 = smul.addr %s299, 8
      %s301 = scalar_lea.vmem %s0, %s300
      %p302 = pneg %p53
      %p303 = pneg %p50
      %p304 = scmp.lt.s32.totalorder %s22, 1
      %s305 = scalar_select %p304, %s22, 1
      %p306 = scmp.lt.s32.totalorder %s23, 0
      %s307 = scalar_select %p306, %s23, 0
      %s308 = smul.addr %s307, 16
      %s309 = smul.addr %s305, 16
      %s310 = sadd.s32 %s308, %s309
      %s311 = smul.addr %s310, 8
      %s312 = scalar_lea.vmem %s1, %s311
      %p313 = pneg %p81
      %p314 = pneg %p78
      %p315 = scmp.lt.s32.totalorder %s22, 1
      %s316 = scalar_select %p315, %s22, 1
      %p317 = scmp.lt.s32.totalorder %s23, 0
      %s318 = scalar_select %p317, %s23, 0
      %s319 = smul.addr %s318, 16
      %s320 = smul.addr %s316, 16
      %s321 = sadd.s32 %s319, %s320
      %s322 = smul.addr %s321, 8
      %s323 = scalar_lea.vmem %s2, %s322
      %p324 = pneg %p109
      %p325 = pneg %p106
      %p326 = pneg %p130
      %p327 = pneg %p127
      %p328 = pneg %p151
      %p329 = pneg %p148
      %p330 = pneg %p172
      %p331 = pneg %p169
      %p332 = pneg %p193
      %p333 = pneg %p190
      %p334 = pneg %p221
      %p335 = pneg %p218
      %p336 = scmp.lt.s32.totalorder %s22, 1
      %s337 = scalar_select %p336, %s22, 1
      %p338 = scmp.lt.s32.totalorder %s23, 0
      %s339 = scalar_select %p338, %s23, 0
      %s340 = sadd.s32 %s339, %s337
      %s341 = smul.addr %s340, 4
      %s342 = scalar_lea.vmem %s7, %s341
      %p343 = scmp.lt.s32.totalorder %s22, 1
      %s344 = scalar_select %p343, %s22, 1
      %p345 = scmp.lt.s32.totalorder %s23, 0
      %s346 = scalar_select %p345, %s23, 0
      %s347 = smul.addr %s344, 16
      %s348 = sadd.s32 %s346, %s347
      %s349 = smul.addr %s348, 8
      %s350 = scalar_lea.vmem %s0, %s349
      %p351 = scmp.lt.s32.totalorder %s22, 1
      %s352 = scalar_select %p351, %s22, 1
      %p353 = scmp.lt.s32.totalorder %s23, 0
      %s354 = scalar_select %p353, %s23, 0
      %s355 = smul.addr %s354, 16
      %s356 = smul.addr %s352, 16
      %s357 = sadd.s32 %s355, %s356
      %s358 = smul.addr %s357, 8
      %s359 = scalar_lea.vmem %s1, %s358
      %p360 = scmp.lt.s32.totalorder %s22, 1
      %s361 = scalar_select %p360, %s22, 1
      %p362 = scmp.lt.s32.totalorder %s23, 0
      %s363 = scalar_select %p362, %s23, 0
      %s364 = smul.addr %s363, 16
      %s365 = smul.addr %s361, 16
      %s366 = sadd.s32 %s364, %s365
      %s367 = smul.addr %s366, 8
      %s368 = scalar_lea.vmem %s2, %s367
      %p369 = scmp.lt.s32.totalorder %s22, 1
      %s370 = scalar_select %p369, %s22, 1
      %p371 = scmp.lt.s32.totalorder %s23, 0
      %s372 = scalar_select %p371, %s23, 0
      %s373 = sadd.s32 %s372, %s370
      %s374 = smul.addr %s373, 4
      %s375 = scalar_lea.vmem %s7, %s374
      %v376 = vld [vmem:[%s359] sm:$0xff]
      %v377 = vld [vmem:[%s359 + $0x8] sm:$0xff]
      %v378 = vld [vmem:[%s359 + $0x10] sm:$0xff]
      %v379 = vld [vmem:[%s359 + $0x18] sm:$0xff]
      %v380 = vld [vmem:[%s359 + $0x20] sm:$0xff]
      %v381 = vld [vmem:[%s359 + $0x28] sm:$0xff]
      %v382 = vld [vmem:[%s359 + $0x30] sm:$0xff]
      %v383 = vld [vmem:[%s359 + $0x38] sm:$0xff]
      %v384 = vld [vmem:[%s359 + $0x40] sm:$0xff]
      %v385 = vld [vmem:[%s359 + $0x48] sm:$0xff]
      %v386 = vld [vmem:[%s359 + $0x50] sm:$0xff]
      %v387 = vld [vmem:[%s359 + $0x58] sm:$0xff]
      %v388 = vld [vmem:[%s359 + $0x60] sm:$0xff]
      %v389 = vld [vmem:[%s359 + $0x68] sm:$0xff]
      %v390 = vld [vmem:[%s359 + $0x70] sm:$0xff]
      %v391 = vld [vmem:[%s359 + $0x78] sm:$0xff]
      %v392 = vld [vmem:[%s350] sm:$0xff]
      %v393 = vld [vmem:[%s350 + $0x8] sm:$0xff]
      %v394 = vld [vmem:[%s350 + $0x10] sm:$0xff]
      %v395 = vld [vmem:[%s350 + $0x18] sm:$0xff]
      %v396 = vld [vmem:[%s350 + $0x20] sm:$0xff]
      %v397 = vld [vmem:[%s350 + $0x28] sm:$0xff]
      %v398 = vld [vmem:[%s350 + $0x30] sm:$0xff]
      %v399 = vld [vmem:[%s350 + $0x38] sm:$0xff]
      %v400 = vld [vmem:[%s350 + $0x40] sm:$0xff]
      %v401 = vld [vmem:[%s350 + $0x48] sm:$0xff]
      %v402 = vld [vmem:[%s350 + $0x50] sm:$0xff]
      %v403 = vld [vmem:[%s350 + $0x58] sm:$0xff]
      %v404 = vld [vmem:[%s350 + $0x60] sm:$0xff]
      %v405 = vld [vmem:[%s350 + $0x68] sm:$0xff]
      %v406 = vld [vmem:[%s350 + $0x70] sm:$0xff]
      %v407 = vld [vmem:[%s350 + $0x78] sm:$0xff]
      %v408 = vld [vmem:[%s368] sm:$0xff]
      %v409 = vld [vmem:[%s368 + $0x8] sm:$0xff]
      %v410 = vld [vmem:[%s368 + $0x10] sm:$0xff]
      %v411 = vld [vmem:[%s368 + $0x18] sm:$0xff]
      %v412 = vld [vmem:[%s368 + $0x20] sm:$0xff]
      %v413 = vld [vmem:[%s368 + $0x28] sm:$0xff]
      %v414 = vld [vmem:[%s368 + $0x30] sm:$0xff]
      %v415 = vld [vmem:[%s368 + $0x38] sm:$0xff]
      %v416 = vld [vmem:[%s368 + $0x40] sm:$0xff]
      %v417 = vld [vmem:[%s368 + $0x48] sm:$0xff]
      %v418 = vld [vmem:[%s368 + $0x50] sm:$0xff]
      %v419 = vld [vmem:[%s368 + $0x58] sm:$0xff]
      %v420 = vld [vmem:[%s368 + $0x60] sm:$0xff]
      %v421 = vld [vmem:[%s368 + $0x68] sm:$0xff]
      %v422 = vld [vmem:[%s368 + $0x70] sm:$0xff]
      %v423 = vld [vmem:[%s368 + $0x78] sm:$0xff]
      %440 = vrot.lane.b32.xlu0 %v392, 1
      %v441 = vpop.permute.xlu0 %440
      %442 = vrot.lane.b32.xlu0 %v393, 1
      %v443 = vpop.permute.xlu0 %442
      %444 = vrot.lane.b32.xlu0 %v394, 1
      %v445 = vpop.permute.xlu0 %444
      %446 = vrot.lane.b32.xlu0 %v395, 1
      %v447 = vpop.permute.xlu0 %446
      %448 = vrot.lane.b32.xlu0 %v396, 1
      %v449 = vpop.permute.xlu0 %448
      %450 = vrot.lane.b32.xlu0 %v397, 1
      %v451 = vpop.permute.xlu0 %450
      %452 = vrot.lane.b32.xlu0 %v398, 1
      %v453 = vpop.permute.xlu0 %452
      %454 = vrot.lane.b32.xlu0 %v399, 1
      %v455 = vpop.permute.xlu0 %454
      %456 = vrot.lane.b32.xlu0 %v400, 1
      %v457 = vpop.permute.xlu0 %456
      %458 = vrot.lane.b32.xlu0 %v401, 1
      %v459 = vpop.permute.xlu0 %458
      %460 = vrot.lane.b32.xlu0 %v402, 1
      %v461 = vpop.permute.xlu0 %460
      %462 = vrot.lane.b32.xlu0 %v403, 1
      %v463 = vpop.permute.xlu0 %462
      %464 = vrot.lane.b32.xlu0 %v404, 1
      %v465 = vpop.permute.xlu0 %464
      %466 = vrot.lane.b32.xlu0 %v405, 1
      %v467 = vpop.permute.xlu0 %466
      %468 = vrot.lane.b32.xlu0 %v406, 1
      %v469 = vpop.permute.xlu0 %468
      %470 = vrot.lane.b32.xlu0 %v407, 1
      %v471 = vpop.permute.xlu0 %470
      %504 = vrot.lane.b32.xlu0 %v408, 5
      %v505 = vpop.permute.xlu0 %504
      %506 = vrot.lane.b32.xlu0 %v409, 5
      %v507 = vpop.permute.xlu0 %506
      %508 = vrot.lane.b32.xlu0 %v410, 5
      %v509 = vpop.permute.xlu0 %508
      %510 = vrot.lane.b32.xlu0 %v411, 5
      %v511 = vpop.permute.xlu0 %510
      %512 = vrot.lane.b32.xlu0 %v412, 5
      %v513 = vpop.permute.xlu0 %512
      %514 = vrot.lane.b32.xlu0 %v413, 5
      %v515 = vpop.permute.xlu0 %514
      %516 = vrot.lane.b32.xlu0 %v414, 5
      %v517 = vpop.permute.xlu0 %516
      %518 = vrot.lane.b32.xlu0 %v415, 5
      %v519 = vpop.permute.xlu0 %518
      %520 = vrot.lane.b32.xlu0 %v416, 5
      %v521 = vpop.permute.xlu0 %520
      %522 = vrot.lane.b32.xlu0 %v417, 5
      %v523 = vpop.permute.xlu0 %522
      %524 = vrot.lane.b32.xlu0 %v418, 5
      %v525 = vpop.permute.xlu0 %524
      %526 = vrot.lane.b32.xlu0 %v419, 5
      %v527 = vpop.permute.xlu0 %526
      %528 = vrot.lane.b32.xlu0 %v420, 5
      %v529 = vpop.permute.xlu0 %528
      %530 = vrot.lane.b32.xlu0 %v421, 5
      %v531 = vpop.permute.xlu0 %530
      %532 = vrot.lane.b32.xlu0 %v422, 5
      %v533 = vpop.permute.xlu0 %532
      %534 = vrot.lane.b32.xlu0 %v423, 5
      %v535 = vpop.permute.xlu0 %534
      %vm552 = vcmask 7168
      %v553 = vsel %vm552, %v376, %v441
      %v554 = vsel %vm552, %v377, %v443
      %v555 = vsel %vm552, %v378, %v445
      %v556 = vsel %vm552, %v379, %v447
      %v557 = vsel %vm552, %v380, %v449
      %v558 = vsel %vm552, %v381, %v451
      %v559 = vsel %vm552, %v382, %v453
      %v560 = vsel %vm552, %v383, %v455
      %v561 = vsel %vm552, %v384, %v457
      %v562 = vsel %vm552, %v385, %v459
      %v563 = vsel %vm552, %v386, %v461
      %v564 = vsel %vm552, %v387, %v463
      %v565 = vsel %vm552, %v388, %v465
      %v566 = vsel %vm552, %v389, %v467
      %v567 = vsel %vm552, %v390, %v469
      %v568 = vsel %vm552, %v391, %v471
      %vm569 = vcmask 39936
      %v570 = vsel %vm569, %v553, %v505
      %v571 = vsel %vm569, %v554, %v507
      %v572 = vsel %vm569, %v555, %v509
      %v573 = vsel %vm569, %v556, %v511
      %v574 = vsel %vm569, %v557, %v513
      %v575 = vsel %vm569, %v558, %v515
      %v576 = vsel %vm569, %v559, %v517
      %v577 = vsel %vm569, %v560, %v519
      %v578 = vsel %vm569, %v561, %v521
      %v579 = vsel %vm569, %v562, %v523
      %v580 = vsel %vm569, %v563, %v525
      %v581 = vsel %vm569, %v564, %v527
      %v582 = vsel %vm569, %v565, %v529
      %v583 = vsel %vm569, %v566, %v531
      %v584 = vsel %vm569, %v567, %v533
      %v585 = vsel %vm569, %v568, %v535
      %v586 = vld [vmem:[%s3] sm:$0xff]
      %v587 = vld [vmem:[%s3 + $0x8] sm:$0xff]
      %v588 = vld [vmem:[%s3 + $0x10] sm:$0xff]
      %v589 = vld [vmem:[%s3 + $0x18] sm:$0xff]
      %v590 = vld [vmem:[%s3 + $0x20] sm:$0xff]
      %v591 = vld [vmem:[%s3 + $0x28] sm:$0xff]
      %v592 = vld [vmem:[%s3 + $0x30] sm:$0xff]
      %v593 = vld [vmem:[%s3 + $0x38] sm:$0xff]
      %v594 = vld [vmem:[%s3 + $0x40] sm:$0xff]
      %v595 = vld [vmem:[%s3 + $0x48] sm:$0xff]
      %v596 = vld [vmem:[%s3 + $0x50] sm:$0xff]
      %v597 = vld [vmem:[%s3 + $0x58] sm:$0xff]
      %v598 = vld [vmem:[%s3 + $0x60] sm:$0xff]
      %v599 = vld [vmem:[%s3 + $0x68] sm:$0xff]
      %v600 = vld [vmem:[%s3 + $0x70] sm:$0xff]
      %v601 = vld [vmem:[%s3 + $0x78] sm:$0xff]
      %v602 = vld [vmem:[%s3 + $0x80] sm:$0xff]
      %v603 = vld [vmem:[%s3 + $0x88] sm:$0xff]
      %v604 = vld [vmem:[%s3 + $0x90] sm:$0xff]
      %v605 = vld [vmem:[%s3 + $0x98] sm:$0xff]
      %v606 = vld [vmem:[%s3 + $0xa0] sm:$0xff]
      %v607 = vld [vmem:[%s3 + $0xa8] sm:$0xff]
      %v608 = vld [vmem:[%s3 + $0xb0] sm:$0xff]
      %v609 = vld [vmem:[%s3 + $0xb8] sm:$0xff]
      %v610 = vld [vmem:[%s3 + $0xc0] sm:$0xff]
      %v611 = vld [vmem:[%s3 + $0xc8] sm:$0xff]
      %v612 = vld [vmem:[%s3 + $0xd0] sm:$0xff]
      %v613 = vld [vmem:[%s3 + $0xd8] sm:$0xff]
      %v614 = vld [vmem:[%s3 + $0xe0] sm:$0xff]
      %v615 = vld [vmem:[%s3 + $0xe8] sm:$0xff]
      %v616 = vld [vmem:[%s3 + $0xf0] sm:$0xff]
      %v617 = vld [vmem:[%s3 + $0xf8] sm:$0xff]
      %618 = vmatprep.subr.mxu0 0.0
      %619 = vmatpush1.msra.mxu0 %v570
      %620 = vmatprep.subr.mxu0 0.0
      %621 = vmatpush1.msra.mxu0 %v571
      %622 = vmatprep.subr.mxu0 0.0
      %623 = vmatpush1.msra.mxu0 %v572
      %624 = vmatprep.subr.mxu0 0.0
      %625 = vmatpush1.msra.mxu0 %v573
      %626 = vmatprep.subr.mxu0 0.0
      %627 = vmatpush1.msra.mxu0 %v574
      %628 = vmatprep.subr.mxu0 0.0
      %629 = vmatpush1.msra.mxu0 %v575
      %630 = vmatprep.subr.mxu0 0.0
      %631 = vmatpush1.msra.mxu0 %v576
      %632 = vmatprep.subr.mxu0 0.0
      %633 = vmatpush1.msra.mxu0 %v577
      %634 = vmatprep.subr.mxu0 0.0
      %635 = vmatpush1.msra.mxu0 %v578
      %636 = vmatprep.subr.mxu0 0.0
      %637 = vmatpush1.msra.mxu0 %v579
      %638 = vmatprep.subr.mxu0 0.0
      %639 = vmatpush1.msra.mxu0 %v580
      %640 = vmatprep.subr.mxu0 0.0
      %641 = vmatpush1.msra.mxu0 %v581
      %642 = vmatprep.subr.mxu0 0.0
      %643 = vmatpush1.msra.mxu0 %v582
      %644 = vmatprep.subr.mxu0 0.0
      %645 = vmatpush1.msra.mxu0 %v583
      %646 = vmatprep.subr.mxu0 0.0
      %647 = vmatpush1.msra.mxu0 %v584
      %648 = vmatprep.subr.mxu0 0.0
      %649 = vmatpush1.msra.mxu0 %v585
      %650 = vmatprep.subr.mxu0 0.0
      %651 = vmatpush1.msra.mxu0 0.0
      %652 = vmatprep.subr.mxu0 0.0
      %653 = vmatpush1.msra.mxu0 0.0
      %654 = vmatprep.subr.mxu0 0.0
      %655 = vmatpush1.msra.mxu0 0.0
      %656 = vmatprep.subr.mxu0 0.0
      %657 = vmatpush1.msra.mxu0 0.0
      %658 = vmatprep.subr.mxu0 0.0
      %659 = vmatpush1.msra.mxu0 0.0
      %660 = vmatprep.subr.mxu0 0.0
      %661 = vmatpush1.msra.mxu0 0.0
      %662 = vmatprep.subr.mxu0 0.0
      %663 = vmatpush1.msra.mxu0 0.0
      %664 = vmatprep.subr.mxu0 0.0
      %665 = vmatpush1.msra.mxu0 0.0
      %666 = vmatprep.subr.mxu0 0.0
      %667 = vmatpush1.msra.mxu0 0.0
      %668 = vmatprep.subr.mxu0 0.0
      %669 = vmatpush1.msra.mxu0 0.0
      %670 = vmatprep.subr.mxu0 0.0
      %671 = vmatpush1.msra.mxu0 0.0
      %672 = vmatprep.subr.mxu0 0.0
      %673 = vmatpush1.msra.mxu0 0.0
      %674 = vmatprep.subr.mxu0 0.0
      %675 = vmatpush1.msra.mxu0 0.0
      %676 = vmatprep.subr.mxu0 0.0
      %677 = vmatpush1.msra.mxu0 0.0
      %678 = vmatprep.subr.mxu0 0.0
      %679 = vmatpush1.msra.mxu0 0.0
      %680 = vmatprep.subr.mxu0 0.0
      %681 = vmatpush1.msra.mxu0 0.0
      %682 = vmatprep.mubr.f32.mxu0 0.0
      %683 = vmatmul.mubr.f32.gmra.mrb[0].mxu0 %v586
      %v684 = vpop.f32.mrb[0].mxu0
      %v685 = vadd.f32 0.0, %v684
      %v686 = vpop.f32.mrb[0].mxu0
      %687 = vmatprep.mubr.f32.mxu0 0.0
      %688 = vmatmul.mubr.f32.gmra.mrb[0].mxu0 %v587
      %v689 = vpop.f32.mrb[0].mxu0
      %v690 = vadd.f32 0.0, %v689
      %v691 = vpop.f32.mrb[0].mxu0
      %692 = vmatprep.mubr.f32.mxu0 0.0
      %693 = vmatmul.mubr.f32.gmra.mrb[0].mxu0 %v588
      %v694 = vpop.f32.mrb[0].mxu0
      %v695 = vadd.f32 0.0, %v694
      %v696 = vpop.f32.mrb[0].mxu0
      %697 = vmatprep.mubr.f32.mxu0 0.0
      %698 = vmatmul.mubr.f32.gmra.mrb[0].mxu0 %v589
      %v699 = vpop.f32.mrb[0].mxu0
      %v700 = vadd.f32 0.0, %v699
      %v701 = vpop.f32.mrb[0].mxu0
      %702 = vmatprep.mubr.f32.mxu0 0.0
      %703 = vmatmul.mubr.f32.gmra.mrb[0].mxu0 %v590
      %v704 = vpop.f32.mrb[0].mxu0
      %v705 = vadd.f32 0.0, %v704
      %v706 = vpop.f32.mrb[0].mxu0
      %707 = vmatprep.mubr.f32.mxu0 0.0
      %708 = vmatmul.mubr.f32.gmra.mrb[0].mxu0 %v591
      %v709 = vpop.f32.mrb[0].mxu0
      %v710 = vadd.f32 0.0, %v709
      %v711 = vpop.f32.mrb[0].mxu0
      %712 = vmatprep.mubr.f32.mxu0 0.0
      %713 = vmatmul.mubr.f32.gmra.mrb[0].mxu0 %v592
      %v714 = vpop.f32.mrb[0].mxu0
      %v715 = vadd.f32 0.0, %v714
      %v716 = vpop.f32.mrb[0].mxu0
      %717 = vmatprep.mubr.f32.mxu0 0.0
      %718 = vmatmul.mubr.f32.gmra.mrb[0].mxu0 %v593
      %v719 = vpop.f32.mrb[0].mxu0
      %v720 = vadd.f32 0.0, %v719
      %v721 = vpop.f32.mrb[0].mxu0
      %722 = vmatprep.mubr.f32.mxu0 0.0
      %723 = vmatmul.mubr.f32.gmra.mrb[0].mxu0 %v594
      %v724 = vpop.f32.mrb[0].mxu0
      %v725 = vadd.f32 0.0, %v724
      %v726 = vpop.f32.mrb[0].mxu0
      %727 = vmatprep.mubr.f32.mxu0 0.0
      %728 = vmatmul.mubr.f32.gmra.mrb[0].mxu0 %v595
      %v729 = vpop.f32.mrb[0].mxu0
      %v730 = vadd.f32 0.0, %v729
      %v731 = vpop.f32.mrb[0].mxu0
      %732 = vmatprep.mubr.f32.mxu0 0.0
      %733 = vmatmul.mubr.f32.gmra.mrb[0].mxu0 %v596
      %v734 = vpop.f32.mrb[0].mxu0
      %v735 = vadd.f32 0.0, %v734
      %v736 = vpop.f32.mrb[0].mxu0
      %737 = vmatprep.mubr.f32.mxu0 0.0
      %738 = vmatmul.mubr.f32.gmra.mrb[0].mxu0 %v597
      %v739 = vpop.f32.mrb[0].mxu0
      %v740 = vadd.f32 0.0, %v739
      %v741 = vpop.f32.mrb[0].mxu0
      %742 = vmatprep.mubr.f32.mxu0 0.0
      %743 = vmatmul.mubr.f32.gmra.mrb[0].mxu0 %v598
      %v744 = vpop.f32.mrb[0].mxu0
      %v745 = vadd.f32 0.0, %v744
      %v746 = vpop.f32.mrb[0].mxu0
      %747 = vmatprep.mubr.f32.mxu0 0.0
      %748 = vmatmul.mubr.f32.gmra.mrb[0].mxu0 %v599
      %v749 = vpop.f32.mrb[0].mxu0
      %v750 = vadd.f32 0.0, %v749
      %v751 = vpop.f32.mrb[0].mxu0
      %752 = vmatprep.mubr.f32.mxu0 0.0
      %753 = vmatmul.mubr.f32.gmra.mrb[0].mxu0 %v600
      %v754 = vpop.f32.mrb[0].mxu0
      %v755 = vadd.f32 0.0, %v754
      %v756 = vpop.f32.mrb[0].mxu0
      %757 = vmatprep.mubr.f32.mxu0 0.0
      %758 = vmatmul.mubr.f32.gmra.mrb[0].mxu0 %v601
      %v759 = vpop.f32.mrb[0].mxu0
      %v760 = vadd.f32 0.0, %v759
      %v761 = vpop.f32.mrb[0].mxu0
      %762 = vmatprep.mubr.f32.mxu0 0.0
      %763 = vmatmul.mubr.f32.gmra.mrb[0].mxu0 %v602
      %v764 = vpop.f32.mrb[0].mxu0
      %v765 = vadd.f32 0.0, %v764
      %v766 = vpop.f32.mrb[0].mxu0
      %767 = vmatprep.mubr.f32.mxu0 0.0
      %768 = vmatmul.mubr.f32.gmra.mrb[0].mxu0 %v603
      %v769 = vpop.f32.mrb[0].mxu0
      %v770 = vadd.f32 0.0, %v769
      %v771 = vpop.f32.mrb[0].mxu0
      %772 = vmatprep.mubr.f32.mxu0 0.0
      %773 = vmatmul.mubr.f32.gmra.mrb[0].mxu0 %v604
      %v774 = vpop.f32.mrb[0].mxu0
      %v775 = vadd.f32 0.0, %v774
      %v776 = vpop.f32.mrb[0].mxu0
      %777 = vmatprep.mubr.f32.mxu0 0.0
      %778 = vmatmul.mubr.f32.gmra.mrb[0].mxu0 %v605
      %v779 = vpop.f32.mrb[0].mxu0
      %v780 = vadd.f32 0.0, %v779
      %v781 = vpop.f32.mrb[0].mxu0
      %782 = vmatprep.mubr.f32.mxu0 0.0
      %783 = vmatmul.mubr.f32.gmra.mrb[0].mxu0 %v606
      %v784 = vpop.f32.mrb[0].mxu0
      %v785 = vadd.f32 0.0, %v784
      %v786 = vpop.f32.mrb[0].mxu0
      %787 = vmatprep.mubr.f32.mxu0 0.0
      %788 = vmatmul.mubr.f32.gmra.mrb[0].mxu0 %v607
      %v789 = vpop.f32.mrb[0].mxu0
      %v790 = vadd.f32 0.0, %v789
      %v791 = vpop.f32.mrb[0].mxu0
      %792 = vmatprep.mubr.f32.mxu0 0.0
      %793 = vmatmul.mubr.f32.gmra.mrb[0].mxu0 %v608
      %v794 = vpop.f32.mrb[0].mxu0
      %v795 = vadd.f32 0.0, %v794
      %v796 = vpop.f32.mrb[0].mxu0
      %797 = vmatprep.mubr.f32.mxu0 0.0
      %798 = vmatmul.mubr.f32.gmra.mrb[0].mxu0 %v609
      %v799 = vpop.f32.mrb[0].mxu0
      %v800 = vadd.f32 0.0, %v799
      %v801 = vpop.f32.mrb[0].mxu0
      %802 = vmatprep.mubr.f32.mxu0 0.0
      %803 = vmatmul.mubr.f32.gmra.mrb[0].mxu0 %v610
      %v804 = vpop.f32.mrb[0].mxu0
      %v805 = vadd.f32 0.0, %v804
      %v806 = vpop.f32.mrb[0].mxu0
      %807 = vmatprep.mubr.f32.mxu0 0.0
      %808 = vmatmul.mubr.f32.gmra.mrb[0].mxu0 %v611
      %v809 = vpop.f32.mrb[0].mxu0
      %v810 = vadd.f32 0.0, %v809
      %v811 = vpop.f32.mrb[0].mxu0
      %812 = vmatprep.mubr.f32.mxu0 0.0
      %813 = vmatmul.mubr.f32.gmra.mrb[0].mxu0 %v612
      %v814 = vpop.f32.mrb[0].mxu0
      %v815 = vadd.f32 0.0, %v814
      %v816 = vpop.f32.mrb[0].mxu0
      %817 = vmatprep.mubr.f32.mxu0 0.0
      %818 = vmatmul.mubr.f32.gmra.mrb[0].mxu0 %v613
      %v819 = vpop.f32.mrb[0].mxu0
      %v820 = vadd.f32 0.0, %v819
      %v821 = vpop.f32.mrb[0].mxu0
      %822 = vmatprep.mubr.f32.mxu0 0.0
      %823 = vmatmul.mubr.f32.gmra.mrb[0].mxu0 %v614
      %v824 = vpop.f32.mrb[0].mxu0
      %v825 = vadd.f32 0.0, %v824
      %v826 = vpop.f32.mrb[0].mxu0
      %827 = vmatprep.mubr.f32.mxu0 0.0
      %828 = vmatmul.mubr.f32.gmra.mrb[0].mxu0 %v615
      %v829 = vpop.f32.mrb[0].mxu0
      %v830 = vadd.f32 0.0, %v829
      %v831 = vpop.f32.mrb[0].mxu0
      %832 = vmatprep.mubr.f32.mxu0 0.0
      %833 = vmatmul.mubr.f32.gmra.mrb[0].mxu0 %v616
      %v834 = vpop.f32.mrb[0].mxu0
      %v835 = vadd.f32 0.0, %v834
      %v836 = vpop.f32.mrb[0].mxu0
      %837 = vmatprep.mubr.f32.mxu0 0.0
      %838 = vmatmul.mubr.f32.gmra.mrb[0].mxu0 %v617
      %v839 = vpop.f32.mrb[0].mxu0
      %v840 = vadd.f32 0.0, %v839
      %v841 = vpop.f32.mrb[0].mxu0
      %842 = vdwg.mxu0
      %859 = vrot.lane.b32.xlu0 %v765, 127
      %v860 = vpop.permute.xlu0 %859
      %861 = vrot.lane.b32.xlu0 %v770, 127
      %v862 = vpop.permute.xlu0 %861
      %863 = vrot.lane.b32.xlu0 %v775, 127
      %v864 = vpop.permute.xlu0 %863
      %865 = vrot.lane.b32.xlu0 %v780, 127
      %v866 = vpop.permute.xlu0 %865
      %867 = vrot.lane.b32.xlu0 %v785, 127
      %v868 = vpop.permute.xlu0 %867
      %869 = vrot.lane.b32.xlu0 %v790, 127
      %v870 = vpop.permute.xlu0 %869
      %871 = vrot.lane.b32.xlu0 %v795, 127
      %v872 = vpop.permute.xlu0 %871
      %873 = vrot.lane.b32.xlu0 %v800, 127
      %v874 = vpop.permute.xlu0 %873
      %875 = vrot.lane.b32.xlu0 %v805, 127
      %v876 = vpop.permute.xlu0 %875
      %877 = vrot.lane.b32.xlu0 %v810, 127
      %v878 = vpop.permute.xlu0 %877
      %879 = vrot.lane.b32.xlu0 %v815, 127
      %v880 = vpop.permute.xlu0 %879
      %881 = vrot.lane.b32.xlu0 %v820, 127
      %v882 = vpop.permute.xlu0 %881
      %883 = vrot.lane.b32.xlu0 %v825, 127
      %v884 = vpop.permute.xlu0 %883
      %885 = vrot.lane.b32.xlu0 %v830, 127
      %v886 = vpop.permute.xlu0 %885
      %887 = vrot.lane.b32.xlu0 %v835, 127
      %v888 = vpop.permute.xlu0 %887
      %889 = vrot.lane.b32.xlu0 %v840, 127
      %v890 = vpop.permute.xlu0 %889
      %v907 = vadd.f32 %v685, %v860
      %v908 = vadd.f32 %v690, %v862
      %v909 = vadd.f32 %v695, %v864
      %v910 = vadd.f32 %v700, %v866
      %v911 = vadd.f32 %v705, %v868
      %v912 = vadd.f32 %v710, %v870
      %v913 = vadd.f32 %v715, %v872
      %v914 = vadd.f32 %v720, %v874
      %v915 = vadd.f32 %v725, %v876
      %v916 = vadd.f32 %v730, %v878
      %v917 = vadd.f32 %v735, %v880
      %v918 = vadd.f32 %v740, %v882
      %v919 = vadd.f32 %v745, %v884
      %v920 = vadd.f32 %v750, %v886
      %v921 = vadd.f32 %v755, %v888
      %v922 = vadd.f32 %v760, %v890
      %v923 = vld [vmem:[%s4] sm:$0xff]
      %v924 = vld [vmem:[%s4 + $0x8] sm:$0xff]
      %v925 = vld [vmem:[%s4 + $0x10] sm:$0xff]
      %v926 = vld [vmem:[%s4 + $0x18] sm:$0xff]
      %v927 = vld [vmem:[%s4 + $0x20] sm:$0xff]
      %v928 = vld [vmem:[%s4 + $0x28] sm:$0xff]
      %v929 = vld [vmem:[%s4 + $0x30] sm:$0xff]
      %v930 = vld [vmem:[%s4 + $0x38] sm:$0xff]
      %v931 = vld [vmem:[%s4 + $0x40] sm:$0xff]
      %v932 = vld [vmem:[%s4 + $0x48] sm:$0xff]
      %v933 = vld [vmem:[%s4 + $0x50] sm:$0xff]
      %v934 = vld [vmem:[%s4 + $0x58] sm:$0xff]
      %v935 = vld [vmem:[%s4 + $0x60] sm:$0xff]
      %v936 = vld [vmem:[%s4 + $0x68] sm:$0xff]
      %v937 = vld [vmem:[%s4 + $0x70] sm:$0xff]
      %v938 = vld [vmem:[%s4 + $0x78] sm:$0xff]
      %940 = vset.pattern.permute.xlu0 0
      %941 = vperm.xlu0 %940, %v923
      %v942 = vpop.permute.xlu0 %941
      %945 = vset.pattern.permute.xlu0 0
      %946 = vperm.xlu0 %945, %v924
      %v947 = vpop.permute.xlu0 %946
      %950 = vset.pattern.permute.xlu0 0
      %951 = vperm.xlu0 %950, %v925
      %v952 = vpop.permute.xlu0 %951
      %955 = vset.pattern.permute.xlu0 0
      %956 = vperm.xlu0 %955, %v926
      %v957 = vpop.permute.xlu0 %956
      %960 = vset.pattern.permute.xlu0 0
      %961 = vperm.xlu0 %960, %v927
      %v962 = vpop.permute.xlu0 %961
      %965 = vset.pattern.permute.xlu0 0
      %966 = vperm.xlu0 %965, %v928
      %v967 = vpop.permute.xlu0 %966
      %970 = vset.pattern.permute.xlu0 0
      %971 = vperm.xlu0 %970, %v929
      %v972 = vpop.permute.xlu0 %971
      %975 = vset.pattern.permute.xlu0 0
      %976 = vperm.xlu0 %975, %v930
      %v977 = vpop.permute.xlu0 %976
      %980 = vset.pattern.permute.xlu0 0
      %981 = vperm.xlu0 %980, %v931
      %v982 = vpop.permute.xlu0 %981
      %985 = vset.pattern.permute.xlu0 0
      %986 = vperm.xlu0 %985, %v932
      %v987 = vpop.permute.xlu0 %986
      %990 = vset.pattern.permute.xlu0 0
      %991 = vperm.xlu0 %990, %v933
      %v992 = vpop.permute.xlu0 %991
      %995 = vset.pattern.permute.xlu0 0
      %996 = vperm.xlu0 %995, %v934
      %v997 = vpop.permute.xlu0 %996
      %1000 = vset.pattern.permute.xlu0 0
      %1001 = vperm.xlu0 %1000, %v935
      %v1002 = vpop.permute.xlu0 %1001
      %1005 = vset.pattern.permute.xlu0 0
      %1006 = vperm.xlu0 %1005, %v936
      %v1007 = vpop.permute.xlu0 %1006
      %1010 = vset.pattern.permute.xlu0 0
      %1011 = vperm.xlu0 %1010, %v937
      %v1012 = vpop.permute.xlu0 %1011
      %1015 = vset.pattern.permute.xlu0 0
      %1016 = vperm.xlu0 %1015, %v938
      %v1017 = vpop.permute.xlu0 %1016
      %v1019 = vadd.f32 %v907, %v942
      %v1020 = vadd.f32 %v908, %v947
      %v1021 = vadd.f32 %v909, %v952
      %v1022 = vadd.f32 %v910, %v957
      %v1023 = vadd.f32 %v911, %v962
      %v1024 = vadd.f32 %v912, %v967
      %v1025 = vadd.f32 %v913, %v972
      %v1026 = vadd.f32 %v914, %v977
      %v1027 = vadd.f32 %v915, %v982
      %v1028 = vadd.f32 %v916, %v987
      %v1029 = vadd.f32 %v917, %v992
      %v1030 = vadd.f32 %v918, %v997
      %v1031 = vadd.f32 %v919, %v1002
      %v1032 = vadd.f32 %v920, %v1007
      %v1033 = vadd.f32 %v921, %v1012
      %v1034 = vadd.f32 %v922, %v1017
      %v1035 = vmax.f32 %v1019, 0.0
      %v1036 = vmax.f32 %v1020, 0.0
      %v1037 = vmax.f32 %v1021, 0.0
      %v1038 = vmax.f32 %v1022, 0.0
      %v1039 = vmax.f32 %v1023, 0.0
      %v1040 = vmax.f32 %v1024, 0.0
      %v1041 = vmax.f32 %v1025, 0.0
      %v1042 = vmax.f32 %v1026, 0.0
      %v1043 = vmax.f32 %v1027, 0.0
      %v1044 = vmax.f32 %v1028, 0.0
      %v1045 = vmax.f32 %v1029, 0.0
      %v1046 = vmax.f32 %v1030, 0.0
      %v1047 = vmax.f32 %v1031, 0.0
      %v1048 = vmax.f32 %v1032, 0.0
      %v1049 = vmax.f32 %v1033, 0.0
      %v1050 = vmax.f32 %v1034, 0.0
      %v1051 = vlaneseq
      %v1052 = vshrl.u32 %v1051, 7
      %v1053 = vadd.s32 %v1052, 8
      %v1054 = vadd.s32 %v1052, 16
      %v1055 = vadd.s32 %v1052, 24
      %v1056 = vadd.s32 %v1052, 32
      %v1057 = vadd.s32 %v1052, 40
      %v1058 = vadd.s32 %v1052, 48
      %v1059 = vadd.s32 %v1052, 56
      %v1060 = vadd.s32 %v1052, 64
      %v1061 = vadd.s32 %v1052, 72
      %v1062 = vadd.s32 %v1052, 80
      %v1063 = vadd.s32 %v1052, 88
      %v1064 = vadd.s32 %v1052, 96
      %v1065 = vadd.s32 %v1052, 104
      %v1066 = vadd.s32 %v1052, 112
      %v1067 = vadd.s32 %v1052, 120
      %v1068 = vlaneseq
      %v1069 = vand.u32 %v1068, 127
      %p1070 = scmp.eq.s32.totalorder %s23, 0
      %vm1071 = vcmp.eq.s32.totalorder %v1069, 0
      %s1072 = scalar_select %p1070, 1, 0
      %v1073 = vstv %s1072
      %vm1074 = vcmp.eq.s32.totalorder %v1073, 1
      %vm1075 = vmand %vm1074, %vm1071
      %vm1076 = vcmp.ge.s32.totalorder %v1052, 64
      %vm1077 = vcmp.ge.s32.totalorder %v1053, 64
      %vm1078 = vcmp.ge.s32.totalorder %v1054, 64
      %vm1079 = vcmp.ge.s32.totalorder %v1055, 64
      %vm1080 = vcmp.ge.s32.totalorder %v1056, 64
      %vm1081 = vcmp.ge.s32.totalorder %v1057, 64
      %vm1082 = vcmp.ge.s32.totalorder %v1058, 64
      %vm1083 = vcmp.ge.s32.totalorder %v1059, 64
      %vm1084 = vcmp.ge.s32.totalorder %v1060, 64
      %vm1085 = vcmp.ge.s32.totalorder %v1061, 64
      %vm1086 = vcmp.ge.s32.totalorder %v1062, 64
      %vm1087 = vcmp.ge.s32.totalorder %v1063, 64
      %vm1088 = vcmp.ge.s32.totalorder %v1064, 64
      %vm1089 = vcmp.ge.s32.totalorder %v1065, 64
      %vm1090 = vcmp.ge.s32.totalorder %v1066, 64
      %vm1091 = vcmp.ge.s32.totalorder %v1067, 64
      %vm1092 = vmand %vm1075, %vm1076
      %vm1093 = vmand %vm1075, %vm1077
      %vm1094 = vmand %vm1075, %vm1078
      %vm1095 = vmand %vm1075, %vm1079
      %vm1096 = vmand %vm1075, %vm1080
      %vm1097 = vmand %vm1075, %vm1081
      %vm1098 = vmand %vm1075, %vm1082
      %vm1099 = vmand %vm1075, %vm1083
      %vm1100 = vmand %vm1075, %vm1084
      %vm1101 = vmand %vm1075, %vm1085
      %vm1102 = vmand %vm1075, %vm1086
      %vm1103 = vmand %vm1075, %vm1087
      %vm1104 = vmand %vm1075, %vm1088
      %vm1105 = vmand %vm1075, %vm1089
      %vm1106 = vmand %vm1075, %vm1090
      %vm1107 = vmand %vm1075, %vm1091
      %v1108 = vsel %vm1092, 0.0, %v1035
      %v1109 = vsel %vm1093, 0.0, %v1036
      %v1110 = vsel %vm1094, 0.0, %v1037
      %v1111 = vsel %vm1095, 0.0, %v1038
      %v1112 = vsel %vm1096, 0.0, %v1039
      %v1113 = vsel %vm1097, 0.0, %v1040
      %v1114 = vsel %vm1098, 0.0, %v1041
      %v1115 = vsel %vm1099, 0.0, %v1042
      %v1116 = vsel %vm1100, 0.0, %v1043
      %v1117 = vsel %vm1101, 0.0, %v1044
      %v1118 = vsel %vm1102, 0.0, %v1045
      %v1119 = vsel %vm1103, 0.0, %v1046
      %v1120 = vsel %vm1104, 0.0, %v1047
      %v1121 = vsel %vm1105, 0.0, %v1048
      %v1122 = vsel %vm1106, 0.0, %v1049
      %v1123 = vsel %vm1107, 0.0, %v1050
      %vm1124 = vcmp.eq.s32.totalorder %v1069, 4
      %vm1125 = vmand %vm1074, %vm1124
      %vm1126 = vcmp.lt.s32.totalorder %v1052, 64
      %vm1127 = vcmp.lt.s32.totalorder %v1053, 64
      %vm1128 = vcmp.lt.s32.totalorder %v1054, 64
      %vm1129 = vcmp.lt.s32.totalorder %v1055, 64
      %vm1130 = vcmp.lt.s32.totalorder %v1056, 64
      %vm1131 = vcmp.lt.s32.totalorder %v1057, 64
      %vm1132 = vcmp.lt.s32.totalorder %v1058, 64
      %vm1133 = vcmp.lt.s32.totalorder %v1059, 64
      %vm1134 = vcmp.lt.s32.totalorder %v1060, 64
      %vm1135 = vcmp.lt.s32.totalorder %v1061, 64
      %vm1136 = vcmp.lt.s32.totalorder %v1062, 64
      %vm1137 = vcmp.lt.s32.totalorder %v1063, 64
      %vm1138 = vcmp.lt.s32.totalorder %v1064, 64
      %vm1139 = vcmp.lt.s32.totalorder %v1065, 64
      %vm1140 = vcmp.lt.s32.totalorder %v1066, 64
      %vm1141 = vcmp.lt.s32.totalorder %v1067, 64
      %vm1142 = vmand %vm1125, %vm1126
      %vm1143 = vmand %vm1125, %vm1127
      %vm1144 = vmand %vm1125, %vm1128
      %vm1145 = vmand %vm1125, %vm1129
      %vm1146 = vmand %vm1125, %vm1130
      %vm1147 = vmand %vm1125, %vm1131
      %vm1148 = vmand %vm1125, %vm1132
      %vm1149 = vmand %vm1125, %vm1133
      %vm1150 = vmand %vm1125, %vm1134
      %vm1151 = vmand %vm1125, %vm1135
      %vm1152 = vmand %vm1125, %vm1136
      %vm1153 = vmand %vm1125, %vm1137
      %vm1154 = vmand %vm1125, %vm1138
      %vm1155 = vmand %vm1125, %vm1139
      %vm1156 = vmand %vm1125, %vm1140
      %vm1157 = vmand %vm1125, %vm1141
      %v1158 = vsel %vm1142, 0.0, %v1108
      %v1159 = vsel %vm1143, 0.0, %v1109
      %v1160 = vsel %vm1144, 0.0, %v1110
      %v1161 = vsel %vm1145, 0.0, %v1111
      %v1162 = vsel %vm1146, 0.0, %v1112
      %v1163 = vsel %vm1147, 0.0, %v1113
      %v1164 = vsel %vm1148, 0.0, %v1114
      %v1165 = vsel %vm1149, 0.0, %v1115
      %v1166 = vsel %vm1150, 0.0, %v1116
      %v1167 = vsel %vm1151, 0.0, %v1117
      %v1168 = vsel %vm1152, 0.0, %v1118
      %v1169 = vsel %vm1153, 0.0, %v1119
      %v1170 = vsel %vm1154, 0.0, %v1120
      %v1171 = vsel %vm1155, 0.0, %v1121
      %v1172 = vsel %vm1156, 0.0, %v1122
      %v1173 = vsel %vm1157, 0.0, %v1123
      %v1174 = vld [vmem:[%s5] sm:$0xff]
      %1175 = vmatprep.subr.mxu0 0.0
      %1176 = vmatpush1.msra.mxu0 %v1158
      %1177 = vmatprep.subr.mxu0 0.0
      %1178 = vmatpush1.msra.mxu0 %v1159
      %1179 = vmatprep.subr.mxu0 0.0
      %1180 = vmatpush1.msra.mxu0 %v1160
      %1181 = vmatprep.subr.mxu0 0.0
      %1182 = vmatpush1.msra.mxu0 %v1161
      %1183 = vmatprep.subr.mxu0 0.0
      %1184 = vmatpush1.msra.mxu0 %v1162
      %1185 = vmatprep.subr.mxu0 0.0
      %1186 = vmatpush1.msra.mxu0 %v1163
      %1187 = vmatprep.subr.mxu0 0.0
      %1188 = vmatpush1.msra.mxu0 %v1164
      %1189 = vmatprep.subr.mxu0 0.0
      %1190 = vmatpush1.msra.mxu0 %v1165
      %1191 = vmatprep.subr.mxu0 0.0
      %1192 = vmatpush1.msra.mxu0 %v1166
      %1193 = vmatprep.subr.mxu0 0.0
      %1194 = vmatpush1.msra.mxu0 %v1167
      %1195 = vmatprep.subr.mxu0 0.0
      %1196 = vmatpush1.msra.mxu0 %v1168
      %1197 = vmatprep.subr.mxu0 0.0
      %1198 = vmatpush1.msra.mxu0 %v1169
      %1199 = vmatprep.subr.mxu0 0.0
      %1200 = vmatpush1.msra.mxu0 %v1170
      %1201 = vmatprep.subr.mxu0 0.0
      %1202 = vmatpush1.msra.mxu0 %v1171
      %1203 = vmatprep.subr.mxu0 0.0
      %1204 = vmatpush1.msra.mxu0 %v1172
      %1205 = vmatprep.subr.mxu0 0.0
      %1206 = vmatpush1.msra.mxu0 %v1173
      %1207 = vmatprep.subr.mxu0 0.0
      %1208 = vmatpush1.msra.mxu0 0.0
      %1209 = vmatprep.subr.mxu0 0.0
      %1210 = vmatpush1.msra.mxu0 0.0
      %1211 = vmatprep.subr.mxu0 0.0
      %1212 = vmatpush1.msra.mxu0 0.0
      %1213 = vmatprep.subr.mxu0 0.0
      %1214 = vmatpush1.msra.mxu0 0.0
      %1215 = vmatprep.subr.mxu0 0.0
      %1216 = vmatpush1.msra.mxu0 0.0
      %1217 = vmatprep.subr.mxu0 0.0
      %1218 = vmatpush1.msra.mxu0 0.0
      %1219 = vmatprep.subr.mxu0 0.0
      %1220 = vmatpush1.msra.mxu0 0.0
      %1221 = vmatprep.subr.mxu0 0.0
      %1222 = vmatpush1.msra.mxu0 0.0
      %1223 = vmatprep.subr.mxu0 0.0
      %1224 = vmatpush1.msra.mxu0 0.0
      %1225 = vmatprep.subr.mxu0 0.0
      %1226 = vmatpush1.msra.mxu0 0.0
      %1227 = vmatprep.subr.mxu0 0.0
      %1228 = vmatpush1.msra.mxu0 0.0
      %1229 = vmatprep.subr.mxu0 0.0
      %1230 = vmatpush1.msra.mxu0 0.0
      %1231 = vmatprep.subr.mxu0 0.0
      %1232 = vmatpush1.msra.mxu0 0.0
      %1233 = vmatprep.subr.mxu0 0.0
      %1234 = vmatpush1.msra.mxu0 0.0
      %1235 = vmatprep.subr.mxu0 0.0
      %1236 = vmatpush1.msra.mxu0 0.0
      %1237 = vmatprep.subr.mxu0 0.0
      %1238 = vmatpush1.msra.mxu0 0.0
      %1239 = vmatprep.mubr.f32.mxu0 0.0
      %1240 = vmatmul.mubr.f32.gmra.mrb[0].mxu0 %v1174
      %v1241 = vpop.f32.mrb[0].mxu0
      %v1242 = vadd.f32 0.0, %v1241
      %v1243 = vpop.f32.mrb[0].mxu0
      %1244 = vdwg.mxu0
      %v1246 = vrot.slane %v1242, 4
      %1247 = vrot.lane.b32.xlu0 %v1246, 127
      %v1248 = vpop.permute.xlu0 %1247
      %v1250 = vadd.f32 %v1242, %v1248
      %v1251 = vld [vmem:[%s6] sm:$0xf]
      %1253 = vset.pattern.permute.xlu0 0
      %1254 = vperm.xlu0 %1253, %v1251
      %v1255 = vpop.permute.xlu0 %1254
      %v1257 = vadd.f32 %v1250, %v1255
      %v1258 = vtanh.pop %v1257
      %vm1259 = vcmask 27648
      %1260 = vst.msk [vmem:[%s375] sm:$0xf] %vm1259, %v1258
      %p1261 = scmp.lt.s32.totalorder %s22, 1
      %s1262 = scalar_select %p1261, %s22, 1
      %p1263 = scmp.lt.s32.totalorder %s23, 0
      %s1264 = scalar_select %p1263, %s23, 0
      %s1265 = sadd.s32 %s1264, %s1262
      %s1266 = smul.addr %s1265, 4
      %s1267 = scalar_lea.vmem %s7, %s1266
      // Predicated region
      $region49: #{audio_decoder_forward.3} parent=47 // pred_check
        %p1268 = pneg %p218
      $region50: #{audio_decoder_forward.3} parent=47 // pred_check_branch
        %1270 = sbr.rel (%p1268) target = $region52
      $region51: #{audio_decoder_forward.3} parent=47 // pred_region
        _
      $region52: #{audio_decoder_forward.3} parent=47 // pred_fallthru
        _
    $region48: #{audio_decoder_forward.3} parent=5 // pred_fallthru
      _
    %p1271 = scmp.le.s32.totalorder 2, %s13
    // Predicated region
    $region53: #{audio_decoder_forward.3} parent=5 // pred_check
      %p1272 = pneg %p1271
    $region54: #{audio_decoder_forward.3} parent=5 // pred_check_branch
      %1274 = sbr.rel (%p1272) target = $region56
    $region55: #{audio_decoder_forward.3} parent=5 // pred_region
      %s1275 = ssub.s32 %s13, 2
      // Predicated region
      $region57: #{audio_decoder_forward.3} parent=55 // pred_check
        %p1276 = pneg %p224
      $region58: #{audio_decoder_forward.3} parent=55 // pred_check_branch
        %1278 = sbr.rel (%p1276) target = $region60
      $region59: #{audio_decoder_forward.3} parent=55 // pred_region
        %p1279 = scmp.lt.s32.totalorder %s24, 1
        %s1280 = scalar_select %p1279, %s24, 1
        %p1281 = scmp.lt.s32.totalorder %s25, 0
        %s1282 = scalar_select %p1281, %s25, 0
        %s1283 = sadd.s32 %s1282, %s1280
        %s1284 = smul.addr %s1283, 4
        %s1285 = scalar_lea.vmem %s7, %s1284
      $region60: #{audio_decoder_forward.3} parent=55 // pred_fallthru
        _
    $region56: #{audio_decoder_forward.3} parent=5 // pred_fallthru
      _
  $region6: #{audio_decoder_forward.3} parent=0 // loop_footer
    %s17 = sadd.s32 1, %s13
  $region7: #{audio_decoder_forward.3} parent=0 // loop_footer_branch
    %12 = sbr.rel target = $region3
  $region8: #{audio_decoder_forward.3} parent=0 // loop_exit
    _

</llo_original>
